<compile_context>
chip_gen: v5e
topology: v5e:2x2
jax: 0.10.0
libtpu: 0.0.40
codegen_flags: <defaults>
</compile_context>

<pallas_src>
import jax
import jax.numpy as jnp
from jax.experimental import pallas as pl
from jax.experimental.pallas import tpu as pltpu

NUM_CLASSES = 200
IN_FEATURES = 2048
LANE = 128
SUBLANE_BF16 = 16


def _round_up(n, m):
    return ((n + m - 1) // m) * m


def fc_kernel(x_ref, w_ref, o_ref):
    """FC tile: out[TB, Npad] = x[TB, K] @ W[K, Npad], f32 accumulation on MXU."""
    o_ref[...] = jnp.dot(
        x_ref[...],                       # bf16 activations (cast in wrapper)
        w_ref[...],                       # bf16 weight (HBM traffic halved)
        preferred_element_type=jnp.float32,
    )


def prepare_fc_weight(w):
    """One-time weight prep (do NOT redo per call):
    PyTorch layout (num_classes, in_features) f32
      -> transposed (in_features, Npad), lane-padded to a multiple of 128, bf16."""
    n, k = w.shape
    n_pad = _round_up(n, LANE)
    w_t = jnp.transpose(w)                         # (K, N)
    w_t = jnp.pad(w_t, ((0, 0), (0, n_pad - n)))   # (K, Npad), zero-padded cols
    return w_t.astype(jnp.bfloat16)


def fc_forward(x, w_t_padded, num_classes=NUM_CLASSES, tb=256):
    """x: (B, IN_FEATURES) f32 or bf16, w_t_padded: (IN_FEATURES, Npad) bf16."""
    B, K = x.shape
    Kw, Npad = w_t_padded.shape
    assert K == Kw and Npad % LANE == 0

    # Narrow activations once in the wrapper (halves activation HBM traffic).
    x_bf16 = x.astype(jnp.bfloat16)

    # Batch tiling: degenerate single tile at small B, grid-parallel at large B.
    tb_eff = min(tb, _round_up(B, SUBLANE_BF16))
    b_pad = _round_up(B, tb_eff)
    if b_pad != B:
        x_bf16 = jnp.pad(x_bf16, ((0, b_pad - B), (0, 0)))
    grid = (b_pad // tb_eff,)

    bytes_accessed = (
        b_pad * K * 2          # bf16 activations
        + K * Npad * 2         # bf16 weight
        + b_pad * Npad * 4     # f32 output
    )

    out = pl.pallas_call(
        fc_kernel,
        out_shape=jax.ShapeDtypeStruct((b_pad, Npad), jnp.float32),
        grid=grid,
        in_specs=[
            pl.BlockSpec((tb_eff, K), lambda i: (i, 0)),
            pl.BlockSpec((K, Npad), lambda i: (0, 0)),   # grid-invariant weight
        ],
        out_specs=pl.BlockSpec((tb_eff, Npad), lambda i: (i, 0)),
        compiler_params=pltpu.CompilerParams(
            dimension_semantics=("parallel",),           # shards over v7x's 2 TCs
            vmem_limit_bytes=64 * 1024 * 1024,
        ),
        cost_estimate=pl.CostEstimate(
            flops=2 * b_pad * K * Npad,
            bytes_accessed=bytes_accessed,
            transcendentals=0,
        ),
    )(x_bf16, w_t_padded)

    return out[:B, :num_classes]


if __name__ == "__main__":
    key = jax.random.PRNGKey(0)
    k_x, k_w = jax.random.split(key)

    B = 8  # small batch
    # TODO(synk): x stands in for model.forward_2's 2048-d feature (backbone not defined).
    x = jax.random.normal(k_x, (B, IN_FEATURES), dtype=jnp.float32)

    # Deterministic fc weight init, PyTorch layout (num_classes, in_features),
    # nn.Linear-like scale 1/sqrt(fan_in).
    bound = 1.0 / jnp.sqrt(jnp.float32(IN_FEATURES))
    w = jax.random.uniform(
        k_w, (NUM_CLASSES, IN_FEATURES), dtype=jnp.float32,
        minval=-bound, maxval=bound,
    )

    # One-time parameter prep (transpose + lane-pad + bf16 cast).
    w_t_padded = prepare_fc_weight(w)

    out = fc_forward(x, w_t_padded)
    out = jax.block_until_ready(out)
    assert out.shape == (B, NUM_CLASSES)

    # Reference with identical numerics (bf16 operands, f32 accumulation).
    ref_bf16 = jnp.dot(
        x.astype(jnp.bfloat16), w_t_padded, preferred_element_type=jnp.float32
    )[:, :NUM_CLASSES]
    assert jnp.allclose(out, ref_bf16, atol=1e-3, rtol=1e-3)

    # Loose check vs. original f32 module semantics (bf16 operands lose ~3 digits,
    # acceptable for classification logits).
    ref_f32 = x @ w.T
    assert jnp.allclose(out, ref_f32, atol=5e-2, rtol=5e-2)

    print("KERNEL_OK")
</pallas_src>

<mosaic_0001>
module attributes {stable_mosaic.version = 11 : i64} {
  func.func @fc_kernel(%arg0: i32, %arg1: memref<16x2048xbf16, #tpu.memory_space<vmem>>, %arg2: memref<2048x256xbf16, #tpu.memory_space<vmem>>, %arg3: memref<16x256xf32, #tpu.memory_space<vmem>>) attributes {dimension_semantics = [#tpu.dimension_semantics<parallel>], iteration_bounds = array<i64: 1>, scalar_prefetch = 0 : i64, scratch_operands = 0 : i64, tpu.core_type = #tpu.core_type<tc>, window_params = [{transform_indices = @transform_0, window_bounds = array<i64: 16, 2048>}, {pipeline_mode = #tpu.pipeline_mode<synchronous>, transform_indices = @transform_1, window_bounds = array<i64: 2048, 256>}, {transform_indices = @transform_2, window_bounds = array<i64: 16, 256>}]} {
    %c0 = arith.constant 0 : index
    %c0_0 = arith.constant 0 : index
    %0 = vector.load %arg1[%c0, %c0_0] : memref<16x2048xbf16, #tpu.memory_space<vmem>>, vector<16x2048xbf16>
    %c0_1 = arith.constant 0 : index
    %c0_2 = arith.constant 0 : index
    %1 = vector.load %arg2[%c0_1, %c0_2] : memref<2048x256xbf16, #tpu.memory_space<vmem>>, vector<2048x256xbf16>
    %cst = arith.constant dense<0.000000e+00> : vector<16x256xf32>
    %2 = tpu.matmul %0, %1, %cst {dimension_numbers = #tpu.dot_dimension_numbers<[1], [0], [0], [1], [0, 0, 1, 1], [], []>} : vector<16x2048xbf16>, vector<2048x256xbf16>, vector<16x256xf32> -> vector<16x256xf32>
    %c0_3 = arith.constant 0 : index
    %c0_4 = arith.constant 0 : index
    %3 = vector.load %arg3[%c0_3, %c0_4] : memref<16x256xf32, #tpu.memory_space<vmem>>, vector<16x256xf32>
    tpu.vector_store %arg3[%c0_3, %c0_4], %2 {strides = array<i32>} : memref<16x256xf32, #tpu.memory_space<vmem>>, vector<16x256xf32>,
    return
  }
  func.func @transform_0(%arg0: i32) -> (i32, i32) {
    %c0_i32 = arith.constant 0 : i32
    %c0_i32_0 = arith.constant 0 : i32
    return %arg0, %c0_i32 : i32, i32
  }
  func.func @transform_1(%arg0: i32) -> (i32, i32) {
    %c0_i32 = arith.constant 0 : i32
    %c0_i32_0 = arith.constant 0 : i32
    %c0_i32_1 = arith.constant 0 : i32
    return %c0_i32, %c0_i32_0 : i32, i32
  }
  func.func @transform_2(%arg0: i32) -> (i32, i32) {
    %c0_i32 = arith.constant 0 : i32
    %c0_i32_0 = arith.constant 0 : i32
    return %arg0, %c0_i32 : i32, i32
  }
}

</mosaic_0001>

<llo_original>
// kernel: tpu_custom_call.1
$region0: #{tpu_custom_call.1}
  #allocation0 [shape = 'u32[]', space=smem, size = 0x4, offset = 0x4, fixed_abs, tag = 'smem constant byte address 0x4 - core index']
  #allocation1 [shape = 'u32[72,128]{1,0:T(1,128)}', space=vmem, size = 0x9000, scoped, tag = 'internal scratch']
  %s0 = inlined_call_operand.hbm [shape: bf16[16,2048], index: 0, kind: input, shape index: {}]
  %s1 = inlined_call_operand.hbm [shape: bf16[2048,256], index: 1, kind: input, shape index: {}]
  %s2 = inlined_call_operand.hbm [shape: f32[16,256], index: 2, kind: output, shape index: {}]
  %s3 = sld [smem:[#allocation0]]
  $region26: #{tpu_custom_call.1} parent=0
    _
  %s5 = ssub.s32 1, %s3
  %s6 = scalar_select 0, %s5, %s3
  $region1: #{tpu_custom_call.1} parent=0
    #allocation2 [shape = 'u8[65536]{0}', space=vmem, size = 0x10000, scoped, tag = 'input window, operand 0, single buffered']
    #allocation3 [shape = 's32[1]{0}', space=sflag, size = 0x4, scoped, tag = 'scoped memory for tpu_custom_call.1']
    #allocation4 [shape = 's32[1]{0}', space=sflag, size = 0x4, scoped, tag = 'scoped memory for tpu_custom_call.1']
    #allocation5 [shape = 'u8[1048576]{0}', space=vmem, size = 0x100000, scoped, tag = 'input window, operand 1, single buffered']
    #allocation6 [shape = 's32[1]{0}', space=sflag, size = 0x4, scoped, tag = 'scoped memory for tpu_custom_call.1']
    #allocation7 [shape = 'u8[16384]{0}', space=vmem, size = 0x4000, scoped, tag = 'output window, operand 0, single buffered']
    %7 = vsyncpa [#allocation3], 0
    %8 = vsyncpa [#allocation6], 0
    %9 = vsyncpa [#allocation4], 0
    // Predicated region
    $region2: #{tpu_custom_call.1} parent=1 // pred_check
      _
    $region3: #{tpu_custom_call.1} parent=1 // pred_check_branch
      %11 = sbr.rel (0) target = $region5
    $region4: #{tpu_custom_call.1} parent=1 // pred_region
      %13 = vsyncadd [#allocation3], 0
      %s14 = sshll.u32 %s0, 4
      %s15 = int_to_ptr.hbm [resolvable:$true] %s14
      %s16 = sshll.u32 [#allocation2], 4
      %s17 = int_to_ptr.vmem [resolvable:$true] %s16
      %22 = dma.hbm_to_vmem [thread:$0]  %s15, 2048, %s17, [#allocation3], 1024, 1024, 64
    $region5: #{tpu_custom_call.1} parent=1 // pred_fallthru
      _
    // Predicated region
    $region6: #{tpu_custom_call.1} parent=1 // pred_check
      _
    $region7: #{tpu_custom_call.1} parent=1 // pred_check_branch
      %24 = sbr.rel (0) target = $region9
    $region8: #{tpu_custom_call.1} parent=1 // pred_region
      %26 = vsyncadd [#allocation6], 0
      %s27 = sshll.u32 %s1, 4
      %s28 = int_to_ptr.hbm [resolvable:$true] %s27
      %s29 = sshll.u32 [#allocation5], 4
      %s30 = int_to_ptr.vmem [resolvable:$true] %s29
      %35 = dma.hbm_to_vmem [thread:$0]  %s28, 32768, %s30, [#allocation6], 128, 128, 8
    $region9: #{tpu_custom_call.1} parent=1 // pred_fallthru
      _
    // Predicated region
    $region10: #{tpu_custom_call.1} parent=1 // pred_check
      _
    $region11: #{tpu_custom_call.1} parent=1 // pred_check_branch
      %37 = sbr.rel (0) target = $region13
    $region12: #{tpu_custom_call.1} parent=1 // pred_region
      %39 = dma.done [#allocation3], 2048
    $region13: #{tpu_custom_call.1} parent=1 // pred_fallthru
      _
    // Predicated region
    $region14: #{tpu_custom_call.1} parent=1 // pred_check
      _
    $region15: #{tpu_custom_call.1} parent=1 // pred_check_branch
      %41 = sbr.rel (0) target = $region17
    $region16: #{tpu_custom_call.1} parent=1 // pred_region
      %43 = dma.done [#allocation6], 32768
    $region17: #{tpu_custom_call.1} parent=1 // pred_fallthru
      _
    %v44 = vld [vmem:[#allocation2] sm:$0xff]
    %v45 = vld [vmem:[#allocation2 + $0x8] sm:$0xff]
    %v46 = vld [vmem:[#allocation2 + $0x10] sm:$0xff]
    %v47 = vld [vmem:[#allocation2 + $0x18] sm:$0xff]
    %v48 = vld [vmem:[#allocation2 + $0x20] sm:$0xff]
    %v49 = vld [vmem:[#allocation2 + $0x28] sm:$0xff]
    %v50 = vld [vmem:[#allocation2 + $0x30] sm:$0xff]
    %v51 = vld [vmem:[#allocation2 + $0x38] sm:$0xff]
    %v52 = vld [vmem:[#allocation2 + $0x40] sm:$0xff]
    %v53 = vld [vmem:[#allocation2 + $0x48] sm:$0xff]
    %v54 = vld [vmem:[#allocation2 + $0x50] sm:$0xff]
    %v55 = vld [vmem:[#allocation2 + $0x58] sm:$0xff]
    %v56 = vld [vmem:[#allocation2 + $0x60] sm:$0xff]
    %v57 = vld [vmem:[#allocation2 + $0x68] sm:$0xff]
    %v58 = vld [vmem:[#allocation2 + $0x70] sm:$0xff]
    %v59 = vld [vmem:[#allocation2 + $0x78] sm:$0xff]
    %v60 = vld [vmem:[#allocation5] sm:$0xff]
    %v61 = vld [vmem:[#allocation5 + $0x8] sm:$0xff]
    %v62 = vld [vmem:[#allocation5 + $0x10] sm:$0xff]
    %v63 = vld [vmem:[#allocation5 + $0x18] sm:$0xff]
    %v64 = vld [vmem:[#allocation5 + $0x20] sm:$0xff]
    %v65 = vld [vmem:[#allocation5 + $0x28] sm:$0xff]
    %v66 = vld [vmem:[#allocation5 + $0x30] sm:$0xff]
    %v67 = vld [vmem:[#allocation5 + $0x38] sm:$0xff]
    %v68 = vld [vmem:[#allocation5 + $0x40] sm:$0xff]
    %v69 = vld [vmem:[#allocation5 + $0x48] sm:$0xff]
    %v70 = vld [vmem:[#allocation5 + $0x50] sm:$0xff]
    %v71 = vld [vmem:[#allocation5 + $0x58] sm:$0xff]
    %v72 = vld [vmem:[#allocation5 + $0x60] sm:$0xff]
    %v73 = vld [vmem:[#allocation5 + $0x68] sm:$0xff]
    %v74 = vld [vmem:[#allocation5 + $0x70] sm:$0xff]
    %v75 = vld [vmem:[#allocation5 + $0x78] sm:$0xff]
    %v76 = vld [vmem:[#allocation5 + $0x80] sm:$0xff]
    %v77 = vld [vmem:[#allocation5 + $0x88] sm:$0xff]
    %v78 = vld [vmem:[#allocation5 + $0x90] sm:$0xff]
    %v79 = vld [vmem:[#allocation5 + $0x98] sm:$0xff]
    %v80 = vld [vmem:[#allocation5 + $0xa0] sm:$0xff]
    %v81 = vld [vmem:[#allocation5 + $0xa8] sm:$0xff]
    %v82 = vld [vmem:[#allocation5 + $0xb0] sm:$0xff]
    %v83 = vld [vmem:[#allocation5 + $0xb8] sm:$0xff]
    %v84 = vld [vmem:[#allocation5 + $0xc0] sm:$0xff]
    %v85 = vld [vmem:[#allocation5 + $0xc8] sm:$0xff]
    %v86 = vld [vmem:[#allocation5 + $0xd0] sm:$0xff]
    %v87 = vld [vmem:[#allocation5 + $0xd8] sm:$0xff]
    %v88 = vld [vmem:[#allocation5 + $0xe0] sm:$0xff]
    %v89 = vld [vmem:[#allocation5 + $0xe8] sm:$0xff]
    %v90 = vld [vmem:[#allocation5 + $0xf0] sm:$0xff]
    %v91 = vld [vmem:[#allocation5 + $0xf8] sm:$0xff]
    %v92 = vld [vmem:[#allocation5 + $0x100] sm:$0xff]
    %v93 = vld [vmem:[#allocation5 + $0x108] sm:$0xff]
    %v94 = vld [vmem:[#allocation5 + $0x110] sm:$0xff]
    %v95 = vld [vmem:[#allocation5 + $0x118] sm:$0xff]
    %v96 = vld [vmem:[#allocation5 + $0x120] sm:$0xff]
    %v97 = vld [vmem:[#allocation5 + $0x128] sm:$0xff]
    %v98 = vld [vmem:[#allocation5 + $0x130] sm:$0xff]
    %v99 = vld [vmem:[#allocation5 + $0x138] sm:$0xff]
    %v100 = vld [vmem:[#allocation5 + $0x140] sm:$0xff]
    %v101 = vld [vmem:[#allocation5 + $0x148] sm:$0xff]
    %v102 = vld [vmem:[#allocation5 + $0x150] sm:$0xff]
    %v103 = vld [vmem:[#allocation5 + $0x158] sm:$0xff]
    %v104 = vld [vmem:[#allocation5 + $0x160] sm:$0xff]
    %v105 = vld [vmem:[#allocation5 + $0x168] sm:$0xff]
    %v106 = vld [vmem:[#allocation5 + $0x170] sm:$0xff]
    %v107 = vld [vmem:[#allocation5 + $0x178] sm:$0xff]
    %v108 = vld [vmem:[#allocation5 + $0x180] sm:$0xff]
    %v109 = vld [vmem:[#allocation5 + $0x188] sm:$0xff]
    %v110 = vld [vmem:[#allocation5 + $0x190] sm:$0xff]
    %v111 = vld [vmem:[#allocation5 + $0x198] sm:$0xff]
    %v112 = vld [vmem:[#allocation5 + $0x1a0] sm:$0xff]
    %v113 = vld [vmem:[#allocation5 + $0x1a8] sm:$0xff]
    %v114 = vld [vmem:[#allocation5 + $0x1b0] sm:$0xff]
    %v115 = vld [vmem:[#allocation5 + $0x1b8] sm:$0xff]
    %v116 = vld [vmem:[#allocation5 + $0x1c0] sm:$0xff]
    %v117 = vld [vmem:[#allocation5 + $0x1c8] sm:$0xff]
    %v118 = vld [vmem:[#allocation5 + $0x1d0] sm:$0xff]
    %v119 = vld [vmem:[#allocation5 + $0x1d8] sm:$0xff]
    %v120 = vld [vmem:[#allocation5 + $0x1e0] sm:$0xff]
    %v121 = vld [vmem:[#allocation5 + $0x1e8] sm:$0xff]
    %v122 = vld [vmem:[#allocation5 + $0x1f0] sm:$0xff]
    %v123 = vld [vmem:[#allocation5 + $0x1f8] sm:$0xff]
    %v124 = vld [vmem:[#allocation5 + $0x200] sm:$0xff]
    %v125 = vld [vmem:[#allocation5 + $0x208] sm:$0xff]
    %v126 = vld [vmem:[#allocation5 + $0x210] sm:$0xff]
    %v127 = vld [vmem:[#allocation5 + $0x218] sm:$0xff]
    %v128 = vld [vmem:[#allocation5 + $0x220] sm:$0xff]
    %v129 = vld [vmem:[#allocation5 + $0x228] sm:$0xff]
    %v130 = vld [vmem:[#allocation5 + $0x230] sm:$0xff]
    %v131 = vld [vmem:[#allocation5 + $0x238] sm:$0xff]
    %v132 = vld [vmem:[#allocation5 + $0x240] sm:$0xff]
    %v133 = vld [vmem:[#allocation5 + $0x248] sm:$0xff]
    %v134 = vld [vmem:[#allocation5 + $0x250] sm:$0xff]
    %v135 = vld [vmem:[#allocation5 + $0x258] sm:$0xff]
    %v136 = vld [vmem:[#allocation5 + $0x260] sm:$0xff]
    %v137 = vld [vmem:[#allocation5 + $0x268] sm:$0xff]
    %v138 = vld [vmem:[#allocation5 + $0x270] sm:$0xff]
    %v139 = vld [vmem:[#allocation5 + $0x278] sm:$0xff]
    %v140 = vld [vmem:[#allocation5 + $0x280] sm:$0xff]
    %v141 = vld [vmem:[#allocation5 + $0x288] sm:$0xff]
    %v142 = vld [vmem:[#allocation5 + $0x290] sm:$0xff]
    %v143 = vld [vmem:[#allocation5 + $0x298] sm:$0xff]
    %v144 = vld [vmem:[#allocation5 + $0x2a0] sm:$0xff]
    %v145 = vld [vmem:[#allocation5 + $0x2a8] sm:$0xff]
    %v146 = vld [vmem:[#allocation5 + $0x2b0] sm:$0xff]
    %v147 = vld [vmem:[#allocation5 + $0x2b8] sm:$0xff]
    %v148 = vld [vmem:[#allocation5 + $0x2c0] sm:$0xff]
    %v149 = vld [vmem:[#allocation5 + $0x2c8] sm:$0xff]
    %v150 = vld [vmem:[#allocation5 + $0x2d0] sm:$0xff]
    %v151 = vld [vmem:[#allocation5 + $0x2d8] sm:$0xff]
    %v152 = vld [vmem:[#allocation5 + $0x2e0] sm:$0xff]
    %v153 = vld [vmem:[#allocation5 + $0x2e8] sm:$0xff]
    %v154 = vld [vmem:[#allocation5 + $0x2f0] sm:$0xff]
    %v155 = vld [vmem:[#allocation5 + $0x2f8] sm:$0xff]
    %v156 = vld [vmem:[#allocation5 + $0x300] sm:$0xff]
    %v157 = vld [vmem:[#allocation5 + $0x308] sm:$0xff]
    %v158 = vld [vmem:[#allocation5 + $0x310] sm:$0xff]
    %v159 = vld [vmem:[#allocation5 + $0x318] sm:$0xff]
    %v160 = vld [vmem:[#allocation5 + $0x320] sm:$0xff]
    %v161 = vld [vmem:[#allocation5 + $0x328] sm:$0xff]
    %v162 = vld [vmem:[#allocation5 + $0x330] sm:$0xff]
    %v163 = vld [vmem:[#allocation5 + $0x338] sm:$0xff]
    %v164 = vld [vmem:[#allocation5 + $0x340] sm:$0xff]
    %v165 = vld [vmem:[#allocation5 + $0x348] sm:$0xff]
    %v166 = vld [vmem:[#allocation5 + $0x350] sm:$0xff]
    %v167 = vld [vmem:[#allocation5 + $0x358] sm:$0xff]
    %v168 = vld [vmem:[#allocation5 + $0x360] sm:$0xff]
    %v169 = vld [vmem:[#allocation5 + $0x368] sm:$0xff]
    %v170 = vld [vmem:[#allocation5 + $0x370] sm:$0xff]
    %v171 = vld [vmem:[#allocation5 + $0x378] sm:$0xff]
    %v172 = vld [vmem:[#allocation5 + $0x380] sm:$0xff]
    %v173 = vld [vmem:[#allocation5 + $0x388] sm:$0xff]
    %v174 = vld [vmem:[#allocation5 + $0x390] sm:$0xff]
    %v175 = vld [vmem:[#allocation5 + $0x398] sm:$0xff]
    %v176 = vld [vmem:[#allocation5 + $0x3a0] sm:$0xff]
    %v177 = vld [vmem:[#allocation5 + $0x3a8] sm:$0xff]
    %v178 = vld [vmem:[#allocation5 + $0x3b0] sm:$0xff]
    %v179 = vld [vmem:[#allocation5 + $0x3b8] sm:$0xff]
    %v180 = vld [vmem:[#allocation5 + $0x3c0] sm:$0xff]
    %v181 = vld [vmem:[#allocation5 + $0x3c8] sm:$0xff]
    %v182 = vld [vmem:[#allocation5 + $0x3d0] sm:$0xff]
    %v183 = vld [vmem:[#allocation5 + $0x3d8] sm:$0xff]
    %v184 = vld [vmem:[#allocation5 + $0x3e0] sm:$0xff]
    %v185 = vld [vmem:[#allocation5 + $0x3e8] sm:$0xff]
    %v186 = vld [vmem:[#allocation5 + $0x3f0] sm:$0xff]
    %v187 = vld [vmem:[#allocation5 + $0x3f8] sm:$0xff]
    %v188 = vld [vmem:[#allocation5 + $0x400] sm:$0xff]
    %v189 = vld [vmem:[#allocation5 + $0x408] sm:$0xff]
    %v190 = vld [vmem:[#allocation5 + $0x410] sm:$0xff]
    %v191 = vld [vmem:[#allocation5 + $0x418] sm:$0xff]
    %v192 = vld [vmem:[#allocation5 + $0x420] sm:$0xff]
    %v193 = vld [vmem:[#allocation5 + $0x428] sm:$0xff]
    %v194 = vld [vmem:[#allocation5 + $0x430] sm:$0xff]
    %v195 = vld [vmem:[#allocation5 + $0x438] sm:$0xff]
    %v196 = vld [vmem:[#allocation5 + $0x440] sm:$0xff]
    %v197 = vld [vmem:[#allocation5 + $0x448] sm:$0xff]
    %v198 = vld [vmem:[#allocation5 + $0x450] sm:$0xff]
    %v199 = vld [vmem:[#allocation5 + $0x458] sm:$0xff]
    %v200 = vld [vmem:[#allocation5 + $0x460] sm:$0xff]
    %v201 = vld [vmem:[#allocation5 + $0x468] sm:$0xff]
    %v202 = vld [vmem:[#allocation5 + $0x470] sm:$0xff]
    %v203 = vld [vmem:[#allocation5 + $0x478] sm:$0xff]
    %v204 = vld [vmem:[#allocation5 + $0x480] sm:$0xff]
    %v205 = vld [vmem:[#allocation5 + $0x488] sm:$0xff]
    %v206 = vld [vmem:[#allocation5 + $0x490] sm:$0xff]
    %v207 = vld [vmem:[#allocation5 + $0x498] sm:$0xff]
    %v208 = vld [vmem:[#allocation5 + $0x4a0] sm:$0xff]
    %v209 = vld [vmem:[#allocation5 + $0x4a8] sm:$0xff]
    %v210 = vld [vmem:[#allocation5 + $0x4b0] sm:$0xff]
    %v211 = vld [vmem:[#allocation5 + $0x4b8] sm:$0xff]
    %v212 = vld [vmem:[#allocation5 + $0x4c0] sm:$0xff]
    %v213 = vld [vmem:[#allocation5 + $0x4c8] sm:$0xff]
    %v214 = vld [vmem:[#allocation5 + $0x4d0] sm:$0xff]
    %v215 = vld [vmem:[#allocation5 + $0x4d8] sm:$0xff]
    %v216 = vld [vmem:[#allocation5 + $0x4e0] sm:$0xff]
    %v217 = vld [vmem:[#allocation5 + $0x4e8] sm:$0xff]
    %v218 = vld [vmem:[#allocation5 + $0x4f0] sm:$0xff]
    %v219 = vld [vmem:[#allocation5 + $0x4f8] sm:$0xff]
    %v220 = vld [vmem:[#allocation5 + $0x500] sm:$0xff]
    %v221 = vld [vmem:[#allocation5 + $0x508] sm:$0xff]
    %v222 = vld [vmem:[#allocation5 + $0x510] sm:$0xff]
    %v223 = vld [vmem:[#allocation5 + $0x518] sm:$0xff]
    %v224 = vld [vmem:[#allocation5 + $0x520] sm:$0xff]
    %v225 = vld [vmem:[#allocation5 + $0x528] sm:$0xff]
    %v226 = vld [vmem:[#allocation5 + $0x530] sm:$0xff]
    %v227 = vld [vmem:[#allocation5 + $0x538] sm:$0xff]
    %v228 = vld [vmem:[#allocation5 + $0x540] sm:$0xff]
    %v229 = vld [vmem:[#allocation5 + $0x548] sm:$0xff]
    %v230 = vld [vmem:[#allocation5 + $0x550] sm:$0xff]
    %v231 = vld [vmem:[#allocation5 + $0x558] sm:$0xff]
    %v232 = vld [vmem:[#allocation5 + $0x560] sm:$0xff]
    %v233 = vld [vmem:[#allocation5 + $0x568] sm:$0xff]
    %v234 = vld [vmem:[#allocation5 + $0x570] sm:$0xff]
    %v235 = vld [vmem:[#allocation5 + $0x578] sm:$0xff]
    %v236 = vld [vmem:[#allocation5 + $0x580] sm:$0xff]
    %v237 = vld [vmem:[#allocation5 + $0x588] sm:$0xff]
    %v238 = vld [vmem:[#allocation5 + $0x590] sm:$0xff]
    %v239 = vld [vmem:[#allocation5 + $0x598] sm:$0xff]
    %v240 = vld [vmem:[#allocation5 + $0x5a0] sm:$0xff]
    %v241 = vld [vmem:[#allocation5 + $0x5a8] sm:$0xff]
    %v242 = vld [vmem:[#allocation5 + $0x5b0] sm:$0xff]
    %v243 = vld [vmem:[#allocation5 + $0x5b8] sm:$0xff]
    %v244 = vld [vmem:[#allocation5 + $0x5c0] sm:$0xff]
    %v245 = vld [vmem:[#allocation5 + $0x5c8] sm:$0xff]
    %v246 = vld [vmem:[#allocation5 + $0x5d0] sm:$0xff]
    %v247 = vld [vmem:[#allocation5 + $0x5d8] sm:$0xff]
    %v248 = vld [vmem:[#allocation5 + $0x5e0] sm:$0xff]
    %v249 = vld [vmem:[#allocation5 + $0x5e8] sm:$0xff]
    %v250 = vld [vmem:[#allocation5 + $0x5f0] sm:$0xff]
    %v251 = vld [vmem:[#allocation5 + $0x5f8] sm:$0xff]
    %v252 = vld [vmem:[#allocation5 + $0x600] sm:$0xff]
    %v253 = vld [vmem:[#allocation5 + $0x608] sm:$0xff]
    %v254 = vld [vmem:[#allocation5 + $0x610] sm:$0xff]
    %v255 = vld [vmem:[#allocation5 + $0x618] sm:$0xff]
    %v256 = vld [vmem:[#allocation5 + $0x620] sm:$0xff]
    %v257 = vld [vmem:[#allocation5 + $0x628] sm:$0xff]
    %v258 = vld [vmem:[#allocation5 + $0x630] sm:$0xff]
    %v259 = vld [vmem:[#allocation5 + $0x638] sm:$0xff]
    %v260 = vld [vmem:[#allocation5 + $0x640] sm:$0xff]
    %v261 = vld [vmem:[#allocation5 + $0x648] sm:$0xff]
    %v262 = vld [vmem:[#allocation5 + $0x650] sm:$0xff]
    %v263 = vld [vmem:[#allocation5 + $0x658] sm:$0xff]
    %v264 = vld [vmem:[#allocation5 + $0x660] sm:$0xff]
    %v265 = vld [vmem:[#allocation5 + $0x668] sm:$0xff]
    %v266 = vld [vmem:[#allocation5 + $0x670] sm:$0xff]
    %v267 = vld [vmem:[#allocation5 + $0x678] sm:$0xff]
    %v268 = vld [vmem:[#allocation5 + $0x680] sm:$0xff]
    %v269 = vld [vmem:[#allocation5 + $0x688] sm:$0xff]
    %v270 = vld [vmem:[#allocation5 + $0x690] sm:$0xff]
    %v271 = vld [vmem:[#allocation5 + $0x698] sm:$0xff]
    %v272 = vld [vmem:[#allocation5 + $0x6a0] sm:$0xff]
    %v273 = vld [vmem:[#allocation5 + $0x6a8] sm:$0xff]
    %v274 = vld [vmem:[#allocation5 + $0x6b0] sm:$0xff]
    %v275 = vld [vmem:[#allocation5 + $0x6b8] sm:$0xff]
    %v276 = vld [vmem:[#allocation5 + $0x6c0] sm:$0xff]
    %v277 = vld [vmem:[#allocation5 + $0x6c8] sm:$0xff]
    %v278 = vld [vmem:[#allocation5 + $0x6d0] sm:$0xff]
    %v279 = vld [vmem:[#allocation5 + $0x6d8] sm:$0xff]
    %v280 = vld [vmem:[#allocation5 + $0x6e0] sm:$0xff]
    %v281 = vld [vmem:[#allocation5 + $0x6e8] sm:$0xff]
    %v282 = vld [vmem:[#allocation5 + $0x6f0] sm:$0xff]
    %v283 = vld [vmem:[#allocation5 + $0x6f8] sm:$0xff]
    %v284 = vld [vmem:[#allocation5 + $0x700] sm:$0xff]
    %v285 = vld [vmem:[#allocation5 + $0x708] sm:$0xff]
    %v286 = vld [vmem:[#allocation5 + $0x710] sm:$0xff]
    %v287 = vld [vmem:[#allocation5 + $0x718] sm:$0xff]
    %v288 = vld [vmem:[#allocation5 + $0x720] sm:$0xff]
    %v289 = vld [vmem:[#allocation5 + $0x728] sm:$0xff]
    %v290 = vld [vmem:[#allocation5 + $0x730] sm:$0xff]
    %v291 = vld [vmem:[#allocation5 + $0x738] sm:$0xff]
    %v292 = vld [vmem:[#allocation5 + $0x740] sm:$0xff]
    %v293 = vld [vmem:[#allocation5 + $0x748] sm:$0xff]
    %v294 = vld [vmem:[#allocation5 + $0x750] sm:$0xff]
    %v295 = vld [vmem:[#allocation5 + $0x758] sm:$0xff]
    %v296 = vld [vmem:[#allocation5 + $0x760] sm:$0xff]
    %v297 = vld [vmem:[#allocation5 + $0x768] sm:$0xff]
    %v298 = vld [vmem:[#allocation5 + $0x770] sm:$0xff]
    %v299 = vld [vmem:[#allocation5 + $0x778] sm:$0xff]
    %v300 = vld [vmem:[#allocation5 + $0x780] sm:$0xff]
    %v301 = vld [vmem:[#allocation5 + $0x788] sm:$0xff]
    %v302 = vld [vmem:[#allocation5 + $0x790] sm:$0xff]
    %v303 = vld [vmem:[#allocation5 + $0x798] sm:$0xff]
    %v304 = vld [vmem:[#allocation5 + $0x7a0] sm:$0xff]
    %v305 = vld [vmem:[#allocation5 + $0x7a8] sm:$0xff]
    %v306 = vld [vmem:[#allocation5 + $0x7b0] sm:$0xff]
    %v307 = vld [vmem:[#allocation5 + $0x7b8] sm:$0xff]
    %v308 = vld [vmem:[#allocation5 + $0x7c0] sm:$0xff]
    %v309 = vld [vmem:[#allocation5 + $0x7c8] sm:$0xff]
    %v310 = vld [vmem:[#allocation5 + $0x7d0] sm:$0xff]
    %v311 = vld [vmem:[#allocation5 + $0x7d8] sm:$0xff]
    %v312 = vld [vmem:[#allocation5 + $0x7e0] sm:$0xff]
    %v313 = vld [vmem:[#allocation5 + $0x7e8] sm:$0xff]
    %v314 = vld [vmem:[#allocation5 + $0x7f0] sm:$0xff]
    %v315 = vld [vmem:[#allocation5 + $0x7f8] sm:$0xff]
    %v332 = vunpack.c.l.b16 %v44
    %v333 = vunpack.c.h.b16 %v44
    %v334 = vunpack.c.l.b16 %v45
    %v335 = vunpack.c.h.b16 %v45
    %v336 = vunpack.c.l.b16 %v46
    %v337 = vunpack.c.h.b16 %v46
    %v338 = vunpack.c.l.b16 %v47
    %v339 = vunpack.c.h.b16 %v47
    %v340 = vunpack.c.l.b16 %v48
    %v341 = vunpack.c.h.b16 %v48
    %v342 = vunpack.c.l.b16 %v49
    %v343 = vunpack.c.h.b16 %v49
    %v344 = vunpack.c.l.b16 %v50
    %v345 = vunpack.c.h.b16 %v50
    %v346 = vunpack.c.l.b16 %v51
    %v347 = vunpack.c.h.b16 %v51
    %v348 = vunpack.c.l.b16 %v52
    %v349 = vunpack.c.h.b16 %v52
    %v350 = vunpack.c.l.b16 %v53
    %v351 = vunpack.c.h.b16 %v53
    %v352 = vunpack.c.l.b16 %v54
    %v353 = vunpack.c.h.b16 %v54
    %v354 = vunpack.c.l.b16 %v55
    %v355 = vunpack.c.h.b16 %v55
    %v356 = vunpack.c.l.b16 %v56
    %v357 = vunpack.c.h.b16 %v56
    %v358 = vunpack.c.l.b16 %v57
    %v359 = vunpack.c.h.b16 %v57
    %v360 = vunpack.c.l.b16 %v58
    %v361 = vunpack.c.h.b16 %v58
    %v362 = vunpack.c.l.b16 %v59
    %v363 = vunpack.c.h.b16 %v59
    %v364 = vpack.c.b16 %v348, %v332
    %v365 = vpack.c.b16 %v349, %v333
    %v366 = vpack.c.b16 %v350, %v334
    %v367 = vpack.c.b16 %v351, %v335
    %v368 = vpack.c.b16 %v352, %v336
    %v369 = vpack.c.b16 %v353, %v337
    %v370 = vpack.c.b16 %v354, %v338
    %v371 = vpack.c.b16 %v355, %v339
    %v372 = vpack.c.b16 %v356, %v340
    %v373 = vpack.c.b16 %v357, %v341
    %v374 = vpack.c.b16 %v358, %v342
    %v375 = vpack.c.b16 %v359, %v343
    %v376 = vpack.c.b16 %v360, %v344
    %v377 = vpack.c.b16 %v361, %v345
    %v378 = vpack.c.b16 %v362, %v346
    %v379 = vpack.c.b16 %v363, %v347
    %v652 = vunpack.c.l.b16 %v60
    %v653 = vunpack.c.h.b16 %v60
    %v654 = vunpack.c.l.b16 %v61
    %v655 = vunpack.c.h.b16 %v61
    %v656 = vunpack.c.l.b16 %v62
    %v657 = vunpack.c.h.b16 %v62
    %v658 = vunpack.c.l.b16 %v63
    %v659 = vunpack.c.h.b16 %v63
    %v660 = vunpack.c.l.b16 %v64
    %v661 = vunpack.c.h.b16 %v64
    %v662 = vunpack.c.l.b16 %v65
    %v663 = vunpack.c.h.b16 %v65
    %v664 = vunpack.c.l.b16 %v66
    %v665 = vunpack.c.h.b16 %v66
    %v666 = vunpack.c.l.b16 %v67
    %v667 = vunpack.c.h.b16 %v67
    %v668 = vunpack.c.l.b16 %v68
    %v669 = vunpack.c.h.b16 %v68
    %v670 = vunpack.c.l.b16 %v69
    %v671 = vunpack.c.h.b16 %v69
    %v672 = vunpack.c.l.b16 %v70
    %v673 = vunpack.c.h.b16 %v70
    %v674 = vunpack.c.l.b16 %v71
    %v675 = vunpack.c.h.b16 %v71
    %v676 = vunpack.c.l.b16 %v72
    %v677 = vunpack.c.h.b16 %v72
    %v678 = vunpack.c.l.b16 %v73
    %v679 = vunpack.c.h.b16 %v73
    %v680 = vunpack.c.l.b16 %v74
    %v681 = vunpack.c.h.b16 %v74
    %v682 = vunpack.c.l.b16 %v75
    %v683 = vunpack.c.h.b16 %v75
    %v684 = vunpack.c.l.b16 %v76
    %v685 = vunpack.c.h.b16 %v76
    %v686 = vunpack.c.l.b16 %v77
    %v687 = vunpack.c.h.b16 %v77
    %v688 = vunpack.c.l.b16 %v78
    %v689 = vunpack.c.h.b16 %v78
    %v690 = vunpack.c.l.b16 %v79
    %v691 = vunpack.c.h.b16 %v79
    %v692 = vunpack.c.l.b16 %v80
    %v693 = vunpack.c.h.b16 %v80
    %v694 = vunpack.c.l.b16 %v81
    %v695 = vunpack.c.h.b16 %v81
    %v696 = vunpack.c.l.b16 %v82
    %v697 = vunpack.c.h.b16 %v82
    %v698 = vunpack.c.l.b16 %v83
    %v699 = vunpack.c.h.b16 %v83
    %v700 = vunpack.c.l.b16 %v84
    %v701 = vunpack.c.h.b16 %v84
    %v702 = vunpack.c.l.b16 %v85
    %v703 = vunpack.c.h.b16 %v85
    %v704 = vunpack.c.l.b16 %v86
    %v705 = vunpack.c.h.b16 %v86
    %v706 = vunpack.c.l.b16 %v87
    %v707 = vunpack.c.h.b16 %v87
    %v708 = vunpack.c.l.b16 %v88
    %v709 = vunpack.c.h.b16 %v88
    %v710 = vunpack.c.l.b16 %v89
    %v711 = vunpack.c.h.b16 %v89
    %v712 = vunpack.c.l.b16 %v90
    %v713 = vunpack.c.h.b16 %v90
    %v714 = vunpack.c.l.b16 %v91
    %v715 = vunpack.c.h.b16 %v91
    %v716 = vunpack.c.l.b16 %v92
    %v717 = vunpack.c.h.b16 %v92
    %v718 = vunpack.c.l.b16 %v93
    %v719 = vunpack.c.h.b16 %v93
    %v720 = vunpack.c.l.b16 %v94
    %v721 = vunpack.c.h.b16 %v94
    %v722 = vunpack.c.l.b16 %v95
    %v723 = vunpack.c.h.b16 %v95
    %v724 = vunpack.c.l.b16 %v96
    %v725 = vunpack.c.h.b16 %v96
    %v726 = vunpack.c.l.b16 %v97
    %v727 = vunpack.c.h.b16 %v97
    %v728 = vunpack.c.l.b16 %v98
    %v729 = vunpack.c.h.b16 %v98
    %v730 = vunpack.c.l.b16 %v99
    %v731 = vunpack.c.h.b16 %v99
    %v732 = vunpack.c.l.b16 %v100
    %v733 = vunpack.c.h.b16 %v100
    %v734 = vunpack.c.l.b16 %v101
    %v735 = vunpack.c.h.b16 %v101
    %v736 = vunpack.c.l.b16 %v102
    %v737 = vunpack.c.h.b16 %v102
    %v738 = vunpack.c.l.b16 %v103
    %v739 = vunpack.c.h.b16 %v103
    %v740 = vunpack.c.l.b16 %v104
    %v741 = vunpack.c.h.b16 %v104
    %v742 = vunpack.c.l.b16 %v105
    %v743 = vunpack.c.h.b16 %v105
    %v744 = vunpack.c.l.b16 %v106
    %v745 = vunpack.c.h.b16 %v106
    %v746 = vunpack.c.l.b16 %v107
    %v747 = vunpack.c.h.b16 %v107
    %v748 = vunpack.c.l.b16 %v108
    %v749 = vunpack.c.h.b16 %v108
    %v750 = vunpack.c.l.b16 %v109
    %v751 = vunpack.c.h.b16 %v109
    %v752 = vunpack.c.l.b16 %v110
    %v753 = vunpack.c.h.b16 %v110
    %v754 = vunpack.c.l.b16 %v111
    %v755 = vunpack.c.h.b16 %v111
    %v756 = vunpack.c.l.b16 %v112
    %v757 = vunpack.c.h.b16 %v112
    %v758 = vunpack.c.l.b16 %v113
    %v759 = vunpack.c.h.b16 %v113
    %v760 = vunpack.c.l.b16 %v114
    %v761 = vunpack.c.h.b16 %v114
    %v762 = vunpack.c.l.b16 %v115
    %v763 = vunpack.c.h.b16 %v115
    %v764 = vunpack.c.l.b16 %v116
    %v765 = vunpack.c.h.b16 %v116
    %v766 = vunpack.c.l.b16 %v117
    %v767 = vunpack.c.h.b16 %v117
    %v768 = vunpack.c.l.b16 %v118
    %v769 = vunpack.c.h.b16 %v118
    %v770 = vunpack.c.l.b16 %v119
    %v771 = vunpack.c.h.b16 %v119
    %v772 = vunpack.c.l.b16 %v120
    %v773 = vunpack.c.h.b16 %v120
    %v774 = vunpack.c.l.b16 %v121
    %v775 = vunpack.c.h.b16 %v121
    %v776 = vunpack.c.l.b16 %v122
    %v777 = vunpack.c.h.b16 %v122
    %v778 = vunpack.c.l.b16 %v123
    %v779 = vunpack.c.h.b16 %v123
    %v780 = vunpack.c.l.b16 %v124
    %v781 = vunpack.c.h.b16 %v124
    %v782 = vunpack.c.l.b16 %v125
    %v783 = vunpack.c.h.b16 %v125
    %v784 = vunpack.c.l.b16 %v126
    %v785 = vunpack.c.h.b16 %v126
    %v786 = vunpack.c.l.b16 %v127
    %v787 = vunpack.c.h.b16 %v127
    %v788 = vunpack.c.l.b16 %v128
    %v789 = vunpack.c.h.b16 %v128
    %v790 = vunpack.c.l.b16 %v129
    %v791 = vunpack.c.h.b16 %v129
    %v792 = vunpack.c.l.b16 %v130
    %v793 = vunpack.c.h.b16 %v130
    %v794 = vunpack.c.l.b16 %v131
    %v795 = vunpack.c.h.b16 %v131
    %v796 = vunpack.c.l.b16 %v132
    %v797 = vunpack.c.h.b16 %v132
    %v798 = vunpack.c.l.b16 %v133
    %v799 = vunpack.c.h.b16 %v133
    %v800 = vunpack.c.l.b16 %v134
    %v801 = vunpack.c.h.b16 %v134
    %v802 = vunpack.c.l.b16 %v135
    %v803 = vunpack.c.h.b16 %v135
    %v804 = vunpack.c.l.b16 %v136
    %v805 = vunpack.c.h.b16 %v136
    %v806 = vunpack.c.l.b16 %v137
    %v807 = vunpack.c.h.b16 %v137
    %v808 = vunpack.c.l.b16 %v138
    %v809 = vunpack.c.h.b16 %v138
    %v810 = vunpack.c.l.b16 %v139
    %v811 = vunpack.c.h.b16 %v139
    %v812 = vunpack.c.l.b16 %v140
    %v813 = vunpack.c.h.b16 %v140
    %v814 = vunpack.c.l.b16 %v141
    %v815 = vunpack.c.h.b16 %v141
    %v816 = vunpack.c.l.b16 %v142
    %v817 = vunpack.c.h.b16 %v142
    %v818 = vunpack.c.l.b16 %v143
    %v819 = vunpack.c.h.b16 %v143
    %v820 = vunpack.c.l.b16 %v144
    %v821 = vunpack.c.h.b16 %v144
    %v822 = vunpack.c.l.b16 %v145
    %v823 = vunpack.c.h.b16 %v145
    %v824 = vunpack.c.l.b16 %v146
    %v825 = vunpack.c.h.b16 %v146
    %v826 = vunpack.c.l.b16 %v147
    %v827 = vunpack.c.h.b16 %v147
    %v828 = vunpack.c.l.b16 %v148
    %v829 = vunpack.c.h.b16 %v148
    %v830 = vunpack.c.l.b16 %v149
    %v831 = vunpack.c.h.b16 %v149
    %v832 = vunpack.c.l.b16 %v150
    %v833 = vunpack.c.h.b16 %v150
    %v834 = vunpack.c.l.b16 %v151
    %v835 = vunpack.c.h.b16 %v151
    %v836 = vunpack.c.l.b16 %v152
    %v837 = vunpack.c.h.b16 %v152
    %v838 = vunpack.c.l.b16 %v153
    %v839 = vunpack.c.h.b16 %v153
    %v840 = vunpack.c.l.b16 %v154
    %v841 = vunpack.c.h.b16 %v154
    %v842 = vunpack.c.l.b16 %v155
    %v843 = vunpack.c.h.b16 %v155
    %v844 = vunpack.c.l.b16 %v156
    %v845 = vunpack.c.h.b16 %v156
    %v846 = vunpack.c.l.b16 %v157
    %v847 = vunpack.c.h.b16 %v157
    %v848 = vunpack.c.l.b16 %v158
    %v849 = vunpack.c.h.b16 %v158
    %v850 = vunpack.c.l.b16 %v159
    %v851 = vunpack.c.h.b16 %v159
    %v852 = vunpack.c.l.b16 %v160
    %v853 = vunpack.c.h.b16 %v160
    %v854 = vunpack.c.l.b16 %v161
    %v855 = vunpack.c.h.b16 %v161
    %v856 = vunpack.c.l.b16 %v162
    %v857 = vunpack.c.h.b16 %v162
    %v858 = vunpack.c.l.b16 %v163
    %v859 = vunpack.c.h.b16 %v163
    %v860 = vunpack.c.l.b16 %v164
    %v861 = vunpack.c.h.b16 %v164
    %v862 = vunpack.c.l.b16 %v165
    %v863 = vunpack.c.h.b16 %v165
    %v864 = vunpack.c.l.b16 %v166
    %v865 = vunpack.c.h.b16 %v166
    %v866 = vunpack.c.l.b16 %v167
    %v867 = vunpack.c.h.b16 %v167
    %v868 = vunpack.c.l.b16 %v168
    %v869 = vunpack.c.h.b16 %v168
    %v870 = vunpack.c.l.b16 %v169
    %v871 = vunpack.c.h.b16 %v169
    %v872 = vunpack.c.l.b16 %v170
    %v873 = vunpack.c.h.b16 %v170
    %v874 = vunpack.c.l.b16 %v171
    %v875 = vunpack.c.h.b16 %v171
    %v876 = vunpack.c.l.b16 %v172
    %v877 = vunpack.c.h.b16 %v172
    %v878 = vunpack.c.l.b16 %v173
    %v879 = vunpack.c.h.b16 %v173
    %v880 = vunpack.c.l.b16 %v174
    %v881 = vunpack.c.h.b16 %v174
    %v882 = vunpack.c.l.b16 %v175
    %v883 = vunpack.c.h.b16 %v175
    %v884 = vunpack.c.l.b16 %v176
    %v885 = vunpack.c.h.b16 %v176
    %v886 = vunpack.c.l.b16 %v177
    %v887 = vunpack.c.h.b16 %v177
    %v888 = vunpack.c.l.b16 %v178
    %v889 = vunpack.c.h.b16 %v178
    %v890 = vunpack.c.l.b16 %v179
    %v891 = vunpack.c.h.b16 %v179
    %v892 = vunpack.c.l.b16 %v180
    %v893 = vunpack.c.h.b16 %v180
    %v894 = vunpack.c.l.b16 %v181
    %v895 = vunpack.c.h.b16 %v181
    %v896 = vunpack.c.l.b16 %v182
    %v897 = vunpack.c.h.b16 %v182
    %v898 = vunpack.c.l.b16 %v183
    %v899 = vunpack.c.h.b16 %v183
    %v900 = vunpack.c.l.b16 %v184
    %v901 = vunpack.c.h.b16 %v184
    %v902 = vunpack.c.l.b16 %v185
    %v903 = vunpack.c.h.b16 %v185
    %v904 = vunpack.c.l.b16 %v186
    %v905 = vunpack.c.h.b16 %v186
    %v906 = vunpack.c.l.b16 %v187
    %v907 = vunpack.c.h.b16 %v187
    %v908 = vunpack.c.l.b16 %v188
    %v909 = vunpack.c.h.b16 %v188
    %v910 = vunpack.c.l.b16 %v189
    %v911 = vunpack.c.h.b16 %v189
    %v912 = vunpack.c.l.b16 %v190
    %v913 = vunpack.c.h.b16 %v190
    %v914 = vunpack.c.l.b16 %v191
    %v915 = vunpack.c.h.b16 %v191
    %v916 = vunpack.c.l.b16 %v192
    %v917 = vunpack.c.h.b16 %v192
    %v918 = vunpack.c.l.b16 %v193
    %v919 = vunpack.c.h.b16 %v193
    %v920 = vunpack.c.l.b16 %v194
    %v921 = vunpack.c.h.b16 %v194
    %v922 = vunpack.c.l.b16 %v195
    %v923 = vunpack.c.h.b16 %v195
    %v924 = vunpack.c.l.b16 %v196
    %v925 = vunpack.c.h.b16 %v196
    %v926 = vunpack.c.l.b16 %v197
    %v927 = vunpack.c.h.b16 %v197
    %v928 = vunpack.c.l.b16 %v198
    %v929 = vunpack.c.h.b16 %v198
    %v930 = vunpack.c.l.b16 %v199
    %v931 = vunpack.c.h.b16 %v199
    %v932 = vunpack.c.l.b16 %v200
    %v933 = vunpack.c.h.b16 %v200
    %v934 = vunpack.c.l.b16 %v201
    %v935 = vunpack.c.h.b16 %v201
    %v936 = vunpack.c.l.b16 %v202
    %v937 = vunpack.c.h.b16 %v202
    %v938 = vunpack.c.l.b16 %v203
    %v939 = vunpack.c.h.b16 %v203
    %v940 = vunpack.c.l.b16 %v204
    %v941 = vunpack.c.h.b16 %v204
    %v942 = vunpack.c.l.b16 %v205
    %v943 = vunpack.c.h.b16 %v205
    %v944 = vunpack.c.l.b16 %v206
    %v945 = vunpack.c.h.b16 %v206
    %v946 = vunpack.c.l.b16 %v207
    %v947 = vunpack.c.h.b16 %v207
    %v948 = vunpack.c.l.b16 %v208
    %v949 = vunpack.c.h.b16 %v208
    %v950 = vunpack.c.l.b16 %v209
    %v951 = vunpack.c.h.b16 %v209
    %v952 = vunpack.c.l.b16 %v210
    %v953 = vunpack.c.h.b16 %v210
    %v954 = vunpack.c.l.b16 %v211
    %v955 = vunpack.c.h.b16 %v211
    %v956 = vunpack.c.l.b16 %v212
    %v957 = vunpack.c.h.b16 %v212
    %v958 = vunpack.c.l.b16 %v213
    %v959 = vunpack.c.h.b16 %v213
    %v960 = vunpack.c.l.b16 %v214
    %v961 = vunpack.c.h.b16 %v214
    %v962 = vunpack.c.l.b16 %v215
    %v963 = vunpack.c.h.b16 %v215
    %v964 = vunpack.c.l.b16 %v216
    %v965 = vunpack.c.h.b16 %v216
    %v966 = vunpack.c.l.b16 %v217
    %v967 = vunpack.c.h.b16 %v217
    %v968 = vunpack.c.l.b16 %v218
    %v969 = vunpack.c.h.b16 %v218
    %v970 = vunpack.c.l.b16 %v219
    %v971 = vunpack.c.h.b16 %v219
    %v972 = vunpack.c.l.b16 %v220
    %v973 = vunpack.c.h.b16 %v220
    %v974 = vunpack.c.l.b16 %v221
    %v975 = vunpack.c.h.b16 %v221
    %v976 = vunpack.c.l.b16 %v222
    %v977 = vunpack.c.h.b16 %v222
    %v978 = vunpack.c.l.b16 %v223
    %v979 = vunpack.c.h.b16 %v223
    %v980 = vunpack.c.l.b16 %v224
    %v981 = vunpack.c.h.b16 %v224
    %v982 = vunpack.c.l.b16 %v225
    %v983 = vunpack.c.h.b16 %v225
    %v984 = vunpack.c.l.b16 %v226
    %v985 = vunpack.c.h.b16 %v226
    %v986 = vunpack.c.l.b16 %v227
    %v987 = vunpack.c.h.b16 %v227
    %v988 = vunpack.c.l.b16 %v228
    %v989 = vunpack.c.h.b16 %v228
    %v990 = vunpack.c.l.b16 %v229
    %v991 = vunpack.c.h.b16 %v229
    %v992 = vunpack.c.l.b16 %v230
    %v993 = vunpack.c.h.b16 %v230
    %v994 = vunpack.c.l.b16 %v231
    %v995 = vunpack.c.h.b16 %v231
    %v996 = vunpack.c.l.b16 %v232
    %v997 = vunpack.c.h.b16 %v232
    %v998 = vunpack.c.l.b16 %v233
    %v999 = vunpack.c.h.b16 %v233
    %v1000 = vunpack.c.l.b16 %v234
    %v1001 = vunpack.c.h.b16 %v234
    %v1002 = vunpack.c.l.b16 %v235
    %v1003 = vunpack.c.h.b16 %v235
    %v1004 = vunpack.c.l.b16 %v236
    %v1005 = vunpack.c.h.b16 %v236
    %v1006 = vunpack.c.l.b16 %v237
    %v1007 = vunpack.c.h.b16 %v237
    %v1008 = vunpack.c.l.b16 %v238
    %v1009 = vunpack.c.h.b16 %v238
    %v1010 = vunpack.c.l.b16 %v239
    %v1011 = vunpack.c.h.b16 %v239
    %v1012 = vunpack.c.l.b16 %v240
    %v1013 = vunpack.c.h.b16 %v240
    %v1014 = vunpack.c.l.b16 %v241
    %v1015 = vunpack.c.h.b16 %v241
    %v1016 = vunpack.c.l.b16 %v242
    %v1017 = vunpack.c.h.b16 %v242
    %v1018 = vunpack.c.l.b16 %v243
    %v1019 = vunpack.c.h.b16 %v243
    %v1020 = vunpack.c.l.b16 %v244
    %v1021 = vunpack.c.h.b16 %v244
    %v1022 = vunpack.c.l.b16 %v245
    %v1023 = vunpack.c.h.b16 %v245
    %v1024 = vunpack.c.l.b16 %v246
    %v1025 = vunpack.c.h.b16 %v246
    %v1026 = vunpack.c.l.b16 %v247
    %v1027 = vunpack.c.h.b16 %v247
    %v1028 = vunpack.c.l.b16 %v248
    %v1029 = vunpack.c.h.b16 %v248
    %v1030 = vunpack.c.l.b16 %v249
    %v1031 = vunpack.c.h.b16 %v249
    %v1032 = vunpack.c.l.b16 %v250
    %v1033 = vunpack.c.h.b16 %v250
    %v1034 = vunpack.c.l.b16 %v251
    %v1035 = vunpack.c.h.b16 %v251
    %v1036 = vunpack.c.l.b16 %v252
    %v1037 = vunpack.c.h.b16 %v252
    %v1038 = vunpack.c.l.b16 %v253
    %v1039 = vunpack.c.h.b16 %v253
    %v1040 = vunpack.c.l.b16 %v254
    %v1041 = vunpack.c.h.b16 %v254
    %v1042 = vunpack.c.l.b16 %v255
    %v1043 = vunpack.c.h.b16 %v255
    %v1044 = vunpack.c.l.b16 %v256
    %v1045 = vunpack.c.h.b16 %v256
    %v1046 = vunpack.c.l.b16 %v257
    %v1047 = vunpack.c.h.b16 %v257
    %v1048 = vunpack.c.l.b16 %v258
    %v1049 = vunpack.c.h.b16 %v258
    %v1050 = vunpack.c.l.b16 %v259
    %v1051 = vunpack.c.h.b16 %v259
    %v1052 = vunpack.c.l.b16 %v260
    %v1053 = vunpack.c.h.b16 %v260
    %v1054 = vunpack.c.l.b16 %v261
    %v1055 = vunpack.c.h.b16 %v261
    %v1056 = vunpack.c.l.b16 %v262
    %v1057 = vunpack.c.h.b16 %v262
    %v1058 = vunpack.c.l.b16 %v263
    %v1059 = vunpack.c.h.b16 %v263
    %v1060 = vunpack.c.l.b16 %v264
    %v1061 = vunpack.c.h.b16 %v264
    %v1062 = vunpack.c.l.b16 %v265
    %v1063 = vunpack.c.h.b16 %v265
    %v1064 = vunpack.c.l.b16 %v266
    %v1065 = vunpack.c.h.b16 %v266
    %v1066 = vunpack.c.l.b16 %v267
    %v1067 = vunpack.c.h.b16 %v267
    %v1068 = vunpack.c.l.b16 %v268
    %v1069 = vunpack.c.h.b16 %v268
    %v1070 = vunpack.c.l.b16 %v269
    %v1071 = vunpack.c.h.b16 %v269
    %v1072 = vunpack.c.l.b16 %v270
    %v1073 = vunpack.c.h.b16 %v270
    %v1074 = vunpack.c.l.b16 %v271
    %v1075 = vunpack.c.h.b16 %v271
    %v1076 = vunpack.c.l.b16 %v272
    %v1077 = vunpack.c.h.b16 %v272
    %v1078 = vunpack.c.l.b16 %v273
    %v1079 = vunpack.c.h.b16 %v273
    %v1080 = vunpack.c.l.b16 %v274
    %v1081 = vunpack.c.h.b16 %v274
    %v1082 = vunpack.c.l.b16 %v275
    %v1083 = vunpack.c.h.b16 %v275
    %v1084 = vunpack.c.l.b16 %v276
    %v1085 = vunpack.c.h.b16 %v276
    %v1086 = vunpack.c.l.b16 %v277
    %v1087 = vunpack.c.h.b16 %v277
    %v1088 = vunpack.c.l.b16 %v278
    %v1089 = vunpack.c.h.b16 %v278
    %v1090 = vunpack.c.l.b16 %v279
    %v1091 = vunpack.c.h.b16 %v279
    %v1092 = vunpack.c.l.b16 %v280
    %v1093 = vunpack.c.h.b16 %v280
    %v1094 = vunpack.c.l.b16 %v281
    %v1095 = vunpack.c.h.b16 %v281
    %v1096 = vunpack.c.l.b16 %v282
    %v1097 = vunpack.c.h.b16 %v282
    %v1098 = vunpack.c.l.b16 %v283
    %v1099 = vunpack.c.h.b16 %v283
    %v1100 = vunpack.c.l.b16 %v284
    %v1101 = vunpack.c.h.b16 %v284
    %v1102 = vunpack.c.l.b16 %v285
    %v1103 = vunpack.c.h.b16 %v285
    %v1104 = vunpack.c.l.b16 %v286
    %v1105 = vunpack.c.h.b16 %v286
    %v1106 = vunpack.c.l.b16 %v287
    %v1107 = vunpack.c.h.b16 %v287
    %v1108 = vunpack.c.l.b16 %v288
    %v1109 = vunpack.c.h.b16 %v288
    %v1110 = vunpack.c.l.b16 %v289
    %v1111 = vunpack.c.h.b16 %v289
    %v1112 = vunpack.c.l.b16 %v290
    %v1113 = vunpack.c.h.b16 %v290
    %v1114 = vunpack.c.l.b16 %v291
    %v1115 = vunpack.c.h.b16 %v291
    %v1116 = vunpack.c.l.b16 %v292
    %v1117 = vunpack.c.h.b16 %v292
    %v1118 = vunpack.c.l.b16 %v293
    %v1119 = vunpack.c.h.b16 %v293
    %v1120 = vunpack.c.l.b16 %v294
    %v1121 = vunpack.c.h.b16 %v294
    %v1122 = vunpack.c.l.b16 %v295
    %v1123 = vunpack.c.h.b16 %v295
    %v1124 = vunpack.c.l.b16 %v296
    %v1125 = vunpack.c.h.b16 %v296
    %v1126 = vunpack.c.l.b16 %v297
    %v1127 = vunpack.c.h.b16 %v297
    %v1128 = vunpack.c.l.b16 %v298
    %v1129 = vunpack.c.h.b16 %v298
    %v1130 = vunpack.c.l.b16 %v299
    %v1131 = vunpack.c.h.b16 %v299
    %v1132 = vunpack.c.l.b16 %v300
    %v1133 = vunpack.c.h.b16 %v300
    %v1134 = vunpack.c.l.b16 %v301
    %v1135 = vunpack.c.h.b16 %v301
    %v1136 = vunpack.c.l.b16 %v302
    %v1137 = vunpack.c.h.b16 %v302
    %v1138 = vunpack.c.l.b16 %v303
    %v1139 = vunpack.c.h.b16 %v303
    %v1140 = vunpack.c.l.b16 %v304
    %v1141 = vunpack.c.h.b16 %v304
    %v1142 = vunpack.c.l.b16 %v305
    %v1143 = vunpack.c.h.b16 %v305
    %v1144 = vunpack.c.l.b16 %v306
    %v1145 = vunpack.c.h.b16 %v306
    %v1146 = vunpack.c.l.b16 %v307
    %v1147 = vunpack.c.h.b16 %v307
    %v1148 = vunpack.c.l.b16 %v308
    %v1149 = vunpack.c.h.b16 %v308
    %v1150 = vunpack.c.l.b16 %v309
    %v1151 = vunpack.c.h.b16 %v309
    %v1152 = vunpack.c.l.b16 %v310
    %v1153 = vunpack.c.h.b16 %v310
    %v1154 = vunpack.c.l.b16 %v311
    %v1155 = vunpack.c.h.b16 %v311
    %v1156 = vunpack.c.l.b16 %v312
    %v1157 = vunpack.c.h.b16 %v312
    %v1158 = vunpack.c.l.b16 %v313
    %v1159 = vunpack.c.h.b16 %v313
    %v1160 = vunpack.c.l.b16 %v314
    %v1161 = vunpack.c.h.b16 %v314
    %v1162 = vunpack.c.l.b16 %v315
    %v1163 = vunpack.c.h.b16 %v315
    %v1164 = vpack.c.b16 %v654, %v652
    %v1165 = vpack.c.b16 %v655, %v653
    %v1166 = vpack.c.b16 %v658, %v656
    %v1167 = vpack.c.b16 %v659, %v657
    %v1168 = vpack.c.b16 %v662, %v660
    %v1169 = vpack.c.b16 %v663, %v661
    %v1170 = vpack.c.b16 %v666, %v664
    %v1171 = vpack.c.b16 %v667, %v665
    %v1172 = vpack.c.b16 %v670, %v668
    %v1173 = vpack.c.b16 %v671, %v669
    %v1174 = vpack.c.b16 %v674, %v672
    %v1175 = vpack.c.b16 %v675, %v673
    %v1176 = vpack.c.b16 %v678, %v676
    %v1177 = vpack.c.b16 %v679, %v677
    %v1178 = vpack.c.b16 %v682, %v680
    %v1179 = vpack.c.b16 %v683, %v681
    %v1180 = vpack.c.b16 %v686, %v684
    %v1181 = vpack.c.b16 %v687, %v685
    %v1182 = vpack.c.b16 %v690, %v688
    %v1183 = vpack.c.b16 %v691, %v689
    %v1184 = vpack.c.b16 %v694, %v692
    %v1185 = vpack.c.b16 %v695, %v693
    %v1186 = vpack.c.b16 %v698, %v696
    %v1187 = vpack.c.b16 %v699, %v697
    %v1188 = vpack.c.b16 %v702, %v700
    %v1189 = vpack.c.b16 %v703, %v701
    %v1190 = vpack.c.b16 %v706, %v704
    %v1191 = vpack.c.b16 %v707, %v705
    %v1192 = vpack.c.b16 %v710, %v708
    %v1193 = vpack.c.b16 %v711, %v709
    %v1194 = vpack.c.b16 %v714, %v712
    %v1195 = vpack.c.b16 %v715, %v713
    %v1196 = vpack.c.b16 %v718, %v716
    %v1197 = vpack.c.b16 %v719, %v717
    %v1198 = vpack.c.b16 %v722, %v720
    %v1199 = vpack.c.b16 %v723, %v721
    %v1200 = vpack.c.b16 %v726, %v724
    %v1201 = vpack.c.b16 %v727, %v725
    %v1202 = vpack.c.b16 %v730, %v728
    %v1203 = vpack.c.b16 %v731, %v729
    %v1204 = vpack.c.b16 %v734, %v732
    %v1205 = vpack.c.b16 %v735, %v733
    %v1206 = vpack.c.b16 %v738, %v736
    %v1207 = vpack.c.b16 %v739, %v737
    %v1208 = vpack.c.b16 %v742, %v740
    %v1209 = vpack.c.b16 %v743, %v741
    %v1210 = vpack.c.b16 %v746, %v744
    %v1211 = vpack.c.b16 %v747, %v745
    %v1212 = vpack.c.b16 %v750, %v748
    %v1213 = vpack.c.b16 %v751, %v749
    %v1214 = vpack.c.b16 %v754, %v752
    %v1215 = vpack.c.b16 %v755, %v753
    %v1216 = vpack.c.b16 %v758, %v756
    %v1217 = vpack.c.b16 %v759, %v757
    %v1218 = vpack.c.b16 %v762, %v760
    %v1219 = vpack.c.b16 %v763, %v761
    %v1220 = vpack.c.b16 %v766, %v764
    %v1221 = vpack.c.b16 %v767, %v765
    %v1222 = vpack.c.b16 %v770, %v768
    %v1223 = vpack.c.b16 %v771, %v769
    %v1224 = vpack.c.b16 %v774, %v772
    %v1225 = vpack.c.b16 %v775, %v773
    %v1226 = vpack.c.b16 %v778, %v776
    %v1227 = vpack.c.b16 %v779, %v777
    %v1228 = vpack.c.b16 %v782, %v780
    %v1229 = vpack.c.b16 %v783, %v781
    %v1230 = vpack.c.b16 %v786, %v784
    %v1231 = vpack.c.b16 %v787, %v785
    %v1232 = vpack.c.b16 %v790, %v788
    %v1233 = vpack.c.b16 %v791, %v789
    %v1234 = vpack.c.b16 %v794, %v792
    %v1235 = vpack.c.b16 %v795, %v793
    %v1236 = vpack.c.b16 %v798, %v796
    %v1237 = vpack.c.b16 %v799, %v797
    %v1238 = vpack.c.b16 %v802, %v800
    %v1239 = vpack.c.b16 %v803, %v801
    %v1240 = vpack.c.b16 %v806, %v804
    %v1241 = vpack.c.b16 %v807, %v805
    %v1242 = vpack.c.b16 %v810, %v808
    %v1243 = vpack.c.b16 %v811, %v809
    %v1244 = vpack.c.b16 %v814, %v812
    %v1245 = vpack.c.b16 %v815, %v813
    %v1246 = vpack.c.b16 %v818, %v816
    %v1247 = vpack.c.b16 %v819, %v817
    %v1248 = vpack.c.b16 %v822, %v820
    %v1249 = vpack.c.b16 %v823, %v821
    %v1250 = vpack.c.b16 %v826, %v824
    %v1251 = vpack.c.b16 %v827, %v825
    %v1252 = vpack.c.b16 %v830, %v828
    %v1253 = vpack.c.b16 %v831, %v829
    %v1254 = vpack.c.b16 %v834, %v832
    %v1255 = vpack.c.b16 %v835, %v833
    %v1256 = vpack.c.b16 %v838, %v836
    %v1257 = vpack.c.b16 %v839, %v837
    %v1258 = vpack.c.b16 %v842, %v840
    %v1259 = vpack.c.b16 %v843, %v841
    %v1260 = vpack.c.b16 %v846, %v844
    %v1261 = vpack.c.b16 %v847, %v845
    %v1262 = vpack.c.b16 %v850, %v848
    %v1263 = vpack.c.b16 %v851, %v849
    %v1264 = vpack.c.b16 %v854, %v852
    %v1265 = vpack.c.b16 %v855, %v853
    %v1266 = vpack.c.b16 %v858, %v856
    %v1267 = vpack.c.b16 %v859, %v857
    %v1268 = vpack.c.b16 %v862, %v860
    %v1269 = vpack.c.b16 %v863, %v861
    %v1270 = vpack.c.b16 %v866, %v864
    %v1271 = vpack.c.b16 %v867, %v865
    %v1272 = vpack.c.b16 %v870, %v868
    %v1273 = vpack.c.b16 %v871, %v869
    %v1274 = vpack.c.b16 %v874, %v872
    %v1275 = vpack.c.b16 %v875, %v873
    %v1276 = vpack.c.b16 %v878, %v876
    %v1277 = vpack.c.b16 %v879, %v877
    %v1278 = vpack.c.b16 %v882, %v880
    %v1279 = vpack.c.b16 %v883, %v881
    %v1280 = vpack.c.b16 %v886, %v884
    %v1281 = vpack.c.b16 %v887, %v885
    %v1282 = vpack.c.b16 %v890, %v888
    %v1283 = vpack.c.b16 %v891, %v889
    %v1284 = vpack.c.b16 %v894, %v892
    %v1285 = vpack.c.b16 %v895, %v893
    %v1286 = vpack.c.b16 %v898, %v896
    %v1287 = vpack.c.b16 %v899, %v897
    %v1288 = vpack.c.b16 %v902, %v900
    %v1289 = vpack.c.b16 %v903, %v901
    %v1290 = vpack.c.b16 %v906, %v904
    %v1291 = vpack.c.b16 %v907, %v905
    %v1292 = vpack.c.b16 %v910, %v908
    %v1293 = vpack.c.b16 %v911, %v909
    %v1294 = vpack.c.b16 %v914, %v912
    %v1295 = vpack.c.b16 %v915, %v913
    %v1296 = vpack.c.b16 %v918, %v916
    %v1297 = vpack.c.b16 %v919, %v917
    %v1298 = vpack.c.b16 %v922, %v920
    %v1299 = vpack.c.b16 %v923, %v921
    %v1300 = vpack.c.b16 %v926, %v924
    %v1301 = vpack.c.b16 %v927, %v925
    %v1302 = vpack.c.b16 %v930, %v928
    %v1303 = vpack.c.b16 %v931, %v929
    %v1304 = vpack.c.b16 %v934, %v932
    %v1305 = vpack.c.b16 %v935, %v933
    %v1306 = vpack.c.b16 %v938, %v936
    %v1307 = vpack.c.b16 %v939, %v937
    %v1308 = vpack.c.b16 %v942, %v940
    %v1309 = vpack.c.b16 %v943, %v941
    %v1310 = vpack.c.b16 %v946, %v944
    %v1311 = vpack.c.b16 %v947, %v945
    %v1312 = vpack.c.b16 %v950, %v948
    %v1313 = vpack.c.b16 %v951, %v949
    %v1314 = vpack.c.b16 %v954, %v952
    %v1315 = vpack.c.b16 %v955, %v953
    %v1316 = vpack.c.b16 %v958, %v956
    %v1317 = vpack.c.b16 %v959, %v957
    %v1318 = vpack.c.b16 %v962, %v960
    %v1319 = vpack.c.b16 %v963, %v961
    %v1320 = vpack.c.b16 %v966, %v964
    %v1321 = vpack.c.b16 %v967, %v965
    %v1322 = vpack.c.b16 %v970, %v968
    %v1323 = vpack.c.b16 %v971, %v969
    %v1324 = vpack.c.b16 %v974, %v972
    %v1325 = vpack.c.b16 %v975, %v973
    %v1326 = vpack.c.b16 %v978, %v976
    %v1327 = vpack.c.b16 %v979, %v977
    %v1328 = vpack.c.b16 %v982, %v980
    %v1329 = vpack.c.b16 %v983, %v981
    %v1330 = vpack.c.b16 %v986, %v984
    %v1331 = vpack.c.b16 %v987, %v985
    %v1332 = vpack.c.b16 %v990, %v988
    %v1333 = vpack.c.b16 %v991, %v989
    %v1334 = vpack.c.b16 %v994, %v992
    %v1335 = vpack.c.b16 %v995, %v993
    %v1336 = vpack.c.b16 %v998, %v996
    %v1337 = vpack.c.b16 %v999, %v997
    %v1338 = vpack.c.b16 %v1002, %v1000
    %v1339 = vpack.c.b16 %v1003, %v1001
    %v1340 = vpack.c.b16 %v1006, %v1004
    %v1341 = vpack.c.b16 %v1007, %v1005
    %v1342 = vpack.c.b16 %v1010, %v1008
    %v1343 = vpack.c.b16 %v1011, %v1009
    %v1344 = vpack.c.b16 %v1014, %v1012
    %v1345 = vpack.c.b16 %v1015, %v1013
    %v1346 = vpack.c.b16 %v1018, %v1016
    %v1347 = vpack.c.b16 %v1019, %v1017
    %v1348 = vpack.c.b16 %v1022, %v1020
    %v1349 = vpack.c.b16 %v1023, %v1021
    %v1350 = vpack.c.b16 %v1026, %v1024
    %v1351 = vpack.c.b16 %v1027, %v1025
    %v1352 = vpack.c.b16 %v1030, %v1028
    %v1353 = vpack.c.b16 %v1031, %v1029
    %v1354 = vpack.c.b16 %v1034, %v1032
    %v1355 = vpack.c.b16 %v1035, %v1033
    %v1356 = vpack.c.b16 %v1038, %v1036
    %v1357 = vpack.c.b16 %v1039, %v1037
    %v1358 = vpack.c.b16 %v1042, %v1040
    %v1359 = vpack.c.b16 %v1043, %v1041
    %v1360 = vpack.c.b16 %v1046, %v1044
    %v1361 = vpack.c.b16 %v1047, %v1045
    %v1362 = vpack.c.b16 %v1050, %v1048
    %v1363 = vpack.c.b16 %v1051, %v1049
    %v1364 = vpack.c.b16 %v1054, %v1052
    %v1365 = vpack.c.b16 %v1055, %v1053
    %v1366 = vpack.c.b16 %v1058, %v1056
    %v1367 = vpack.c.b16 %v1059, %v1057
    %v1368 = vpack.c.b16 %v1062, %v1060
    %v1369 = vpack.c.b16 %v1063, %v1061
    %v1370 = vpack.c.b16 %v1066, %v1064
    %v1371 = vpack.c.b16 %v1067, %v1065
    %v1372 = vpack.c.b16 %v1070, %v1068
    %v1373 = vpack.c.b16 %v1071, %v1069
    %v1374 = vpack.c.b16 %v1074, %v1072
    %v1375 = vpack.c.b16 %v1075, %v1073
    %v1376 = vpack.c.b16 %v1078, %v1076
    %v1377 = vpack.c.b16 %v1079, %v1077
    %v1378 = vpack.c.b16 %v1082, %v1080
    %v1379 = vpack.c.b16 %v1083, %v1081
    %v1380 = vpack.c.b16 %v1086, %v1084
    %v1381 = vpack.c.b16 %v1087, %v1085
    %v1382 = vpack.c.b16 %v1090, %v1088
    %v1383 = vpack.c.b16 %v1091, %v1089
    %v1384 = vpack.c.b16 %v1094, %v1092
    %v1385 = vpack.c.b16 %v1095, %v1093
    %v1386 = vpack.c.b16 %v1098, %v1096
    %v1387 = vpack.c.b16 %v1099, %v1097
    %v1388 = vpack.c.b16 %v1102, %v1100
    %v1389 = vpack.c.b16 %v1103, %v1101
    %v1390 = vpack.c.b16 %v1106, %v1104
    %v1391 = vpack.c.b16 %v1107, %v1105
    %v1392 = vpack.c.b16 %v1110, %v1108
    %v1393 = vpack.c.b16 %v1111, %v1109
    %v1394 = vpack.c.b16 %v1114, %v1112
    %v1395 = vpack.c.b16 %v1115, %v1113
    %v1396 = vpack.c.b16 %v1118, %v1116
    %v1397 = vpack.c.b16 %v1119, %v1117
    %v1398 = vpack.c.b16 %v1122, %v1120
    %v1399 = vpack.c.b16 %v1123, %v1121
    %v1400 = vpack.c.b16 %v1126, %v1124
    %v1401 = vpack.c.b16 %v1127, %v1125
    %v1402 = vpack.c.b16 %v1130, %v1128
    %v1403 = vpack.c.b16 %v1131, %v1129
    %v1404 = vpack.c.b16 %v1134, %v1132
    %v1405 = vpack.c.b16 %v1135, %v1133
    %v1406 = vpack.c.b16 %v1138, %v1136
    %v1407 = vpack.c.b16 %v1139, %v1137
    %v1408 = vpack.c.b16 %v1142, %v1140
    %v1409 = vpack.c.b16 %v1143, %v1141
    %v1410 = vpack.c.b16 %v1146, %v1144
    %v1411 = vpack.c.b16 %v1147, %v1145
    %v1412 = vpack.c.b16 %v1150, %v1148
    %v1413 = vpack.c.b16 %v1151, %v1149
    %v1414 = vpack.c.b16 %v1154, %v1152
    %v1415 = vpack.c.b16 %v1155, %v1153
    %v1416 = vpack.c.b16 %v1158, %v1156
    %v1417 = vpack.c.b16 %v1159, %v1157
    %v1418 = vpack.c.b16 %v1162, %v1160
    %v1419 = vpack.c.b16 %v1163, %v1161
    %1676 = vmatpush.bf16.msra.mxu0 %v1178
    %1677 = vmatpush.bf16.msra.mxu0 %v1176
    %1678 = vmatpush.bf16.msra.mxu0 %v1174
    %1679 = vmatpush.bf16.msra.mxu0 %v1172
    %1680 = vmatpush.bf16.msra.mxu0 %v1170
    %1681 = vmatpush.bf16.msra.mxu0 %v1168
    %1682 = vmatpush.bf16.msra.mxu0 %v1166
    %1683 = vmatpush.bf16.msra.mxu0 %v1164
    %1684 = vmatmul.bf16.gmra.mxu0 %v364
    %v1685 = vpop.f32.mrf.mxu0
    %v1686 = vadd.f32 0.0, %v1685
    %v1687 = vpop.f32.mrf.mxu0
    %v1688 = vadd.f32 0.0, %v1687
    %1689 = vdwg.mxu0
    %1690 = vmatpush.bf16.msra.mxu0 %v1194
    %1691 = vmatpush.bf16.msra.mxu0 %v1192
    %1692 = vmatpush.bf16.msra.mxu0 %v1190
    %1693 = vmatpush.bf16.msra.mxu0 %v1188
    %1694 = vmatpush.bf16.msra.mxu0 %v1186
    %1695 = vmatpush.bf16.msra.mxu0 %v1184
    %1696 = vmatpush.bf16.msra.mxu0 %v1182
    %1697 = vmatpush.bf16.msra.mxu0 %v1180
    %1698 = vmatmul.bf16.gmra.mxu0 %v365
    %v1699 = vpop.f32.mrf.mxu0
    %v1700 = vadd.f32 %v1686, %v1699
    %v1701 = vpop.f32.mrf.mxu0
    %v1702 = vadd.f32 %v1688, %v1701
    %1703 = vdwg.mxu0
    %1704 = vmatpush.bf16.msra.mxu0 %v1210
    %1705 = vmatpush.bf16.msra.mxu0 %v1208
    %1706 = vmatpush.bf16.msra.mxu0 %v1206
    %1707 = vmatpush.bf16.msra.mxu0 %v1204
    %1708 = vmatpush.bf16.msra.mxu0 %v1202
    %1709 = vmatpush.bf16.msra.mxu0 %v1200
    %1710 = vmatpush.bf16.msra.mxu0 %v1198
    %1711 = vmatpush.bf16.msra.mxu0 %v1196
    %1712 = vmatmul.bf16.gmra.mxu0 %v366
    %v1713 = vpop.f32.mrf.mxu0
    %v1714 = vadd.f32 %v1700, %v1713
    %v1715 = vpop.f32.mrf.mxu0
    %v1716 = vadd.f32 %v1702, %v1715
    %1717 = vdwg.mxu0
    %1718 = vmatpush.bf16.msra.mxu0 %v1226
    %1719 = vmatpush.bf16.msra.mxu0 %v1224
    %1720 = vmatpush.bf16.msra.mxu0 %v1222
    %1721 = vmatpush.bf16.msra.mxu0 %v1220
    %1722 = vmatpush.bf16.msra.mxu0 %v1218
    %1723 = vmatpush.bf16.msra.mxu0 %v1216
    %1724 = vmatpush.bf16.msra.mxu0 %v1214
    %1725 = vmatpush.bf16.msra.mxu0 %v1212
    %1726 = vmatmul.bf16.gmra.mxu0 %v367
    %v1727 = vpop.f32.mrf.mxu0
    %v1728 = vadd.f32 %v1714, %v1727
    %v1729 = vpop.f32.mrf.mxu0
    %v1730 = vadd.f32 %v1716, %v1729
    %1731 = vdwg.mxu0
    %1732 = vmatpush.bf16.msra.mxu0 %v1242
    %1733 = vmatpush.bf16.msra.mxu0 %v1240
    %1734 = vmatpush.bf16.msra.mxu0 %v1238
    %1735 = vmatpush.bf16.msra.mxu0 %v1236
    %1736 = vmatpush.bf16.msra.mxu0 %v1234
    %1737 = vmatpush.bf16.msra.mxu0 %v1232
    %1738 = vmatpush.bf16.msra.mxu0 %v1230
    %1739 = vmatpush.bf16.msra.mxu0 %v1228
    %1740 = vmatmul.bf16.gmra.mxu0 %v368
    %v1741 = vpop.f32.mrf.mxu0
    %v1742 = vadd.f32 %v1728, %v1741
    %v1743 = vpop.f32.mrf.mxu0
    %v1744 = vadd.f32 %v1730, %v1743
    %1745 = vdwg.mxu0
    %1746 = vmatpush.bf16.msra.mxu0 %v1258
    %1747 = vmatpush.bf16.msra.mxu0 %v1256
    %1748 = vmatpush.bf16.msra.mxu0 %v1254
    %1749 = vmatpush.bf16.msra.mxu0 %v1252
    %1750 = vmatpush.bf16.msra.mxu0 %v1250
    %1751 = vmatpush.bf16.msra.mxu0 %v1248
    %1752 = vmatpush.bf16.msra.mxu0 %v1246
    %1753 = vmatpush.bf16.msra.mxu0 %v1244
    %1754 = vmatmul.bf16.gmra.mxu0 %v369
    %v1755 = vpop.f32.mrf.mxu0
    %v1756 = vadd.f32 %v1742, %v1755
    %v1757 = vpop.f32.mrf.mxu0
    %v1758 = vadd.f32 %v1744, %v1757
    %1759 = vdwg.mxu0
    %1760 = vmatpush.bf16.msra.mxu0 %v1274
    %1761 = vmatpush.bf16.msra.mxu0 %v1272
    %1762 = vmatpush.bf16.msra.mxu0 %v1270
    %1763 = vmatpush.bf16.msra.mxu0 %v1268
    %1764 = vmatpush.bf16.msra.mxu0 %v1266
    %1765 = vmatpush.bf16.msra.mxu0 %v1264
    %1766 = vmatpush.bf16.msra.mxu0 %v1262
    %1767 = vmatpush.bf16.msra.mxu0 %v1260
    %1768 = vmatmul.bf16.gmra.mxu0 %v370
    %v1769 = vpop.f32.mrf.mxu0
    %v1770 = vadd.f32 %v1756, %v1769
    %v1771 = vpop.f32.mrf.mxu0
    %v1772 = vadd.f32 %v1758, %v1771
    %1773 = vdwg.mxu0
    %1774 = vmatpush.bf16.msra.mxu0 %v1290
    %1775 = vmatpush.bf16.msra.mxu0 %v1288
    %1776 = vmatpush.bf16.msra.mxu0 %v1286
    %1777 = vmatpush.bf16.msra.mxu0 %v1284
    %1778 = vmatpush.bf16.msra.mxu0 %v1282
    %1779 = vmatpush.bf16.msra.mxu0 %v1280
    %1780 = vmatpush.bf16.msra.mxu0 %v1278
    %1781 = vmatpush.bf16.msra.mxu0 %v1276
    %1782 = vmatmul.bf16.gmra.mxu0 %v371
    %v1783 = vpop.f32.mrf.mxu0
    %v1784 = vadd.f32 %v1770, %v1783
    %v1785 = vpop.f32.mrf.mxu0
    %v1786 = vadd.f32 %v1772, %v1785
    %1787 = vdwg.mxu0
    %1788 = vmatpush.bf16.msra.mxu0 %v1306
    %1789 = vmatpush.bf16.msra.mxu0 %v1304
    %1790 = vmatpush.bf16.msra.mxu0 %v1302
    %1791 = vmatpush.bf16.msra.mxu0 %v1300
    %1792 = vmatpush.bf16.msra.mxu0 %v1298
    %1793 = vmatpush.bf16.msra.mxu0 %v1296
    %1794 = vmatpush.bf16.msra.mxu0 %v1294
    %1795 = vmatpush.bf16.msra.mxu0 %v1292
    %1796 = vmatmul.bf16.gmra.mxu0 %v372
    %v1797 = vpop.f32.mrf.mxu0
    %v1798 = vadd.f32 %v1784, %v1797
    %v1799 = vpop.f32.mrf.mxu0
    %v1800 = vadd.f32 %v1786, %v1799
    %1801 = vdwg.mxu0
    %1802 = vmatpush.bf16.msra.mxu0 %v1322
    %1803 = vmatpush.bf16.msra.mxu0 %v1320
    %1804 = vmatpush.bf16.msra.mxu0 %v1318
    %1805 = vmatpush.bf16.msra.mxu0 %v1316
    %1806 = vmatpush.bf16.msra.mxu0 %v1314
    %1807 = vmatpush.bf16.msra.mxu0 %v1312
    %1808 = vmatpush.bf16.msra.mxu0 %v1310
    %1809 = vmatpush.bf16.msra.mxu0 %v1308
    %1810 = vmatmul.bf16.gmra.mxu0 %v373
    %v1811 = vpop.f32.mrf.mxu0
    %v1812 = vadd.f32 %v1798, %v1811
    %v1813 = vpop.f32.mrf.mxu0
    %v1814 = vadd.f32 %v1800, %v1813
    %1815 = vdwg.mxu0
    %1816 = vmatpush.bf16.msra.mxu0 %v1338
    %1817 = vmatpush.bf16.msra.mxu0 %v1336
    %1818 = vmatpush.bf16.msra.mxu0 %v1334
    %1819 = vmatpush.bf16.msra.mxu0 %v1332
    %1820 = vmatpush.bf16.msra.mxu0 %v1330
    %1821 = vmatpush.bf16.msra.mxu0 %v1328
    %1822 = vmatpush.bf16.msra.mxu0 %v1326
    %1823 = vmatpush.bf16.msra.mxu0 %v1324
    %1824 = vmatmul.bf16.gmra.mxu0 %v374
    %v1825 = vpop.f32.mrf.mxu0
    %v1826 = vadd.f32 %v1812, %v1825
    %v1827 = vpop.f32.mrf.mxu0
    %v1828 = vadd.f32 %v1814, %v1827
    %1829 = vdwg.mxu0
    %1830 = vmatpush.bf16.msra.mxu0 %v1354
    %1831 = vmatpush.bf16.msra.mxu0 %v1352
    %1832 = vmatpush.bf16.msra.mxu0 %v1350
    %1833 = vmatpush.bf16.msra.mxu0 %v1348
    %1834 = vmatpush.bf16.msra.mxu0 %v1346
    %1835 = vmatpush.bf16.msra.mxu0 %v1344
    %1836 = vmatpush.bf16.msra.mxu0 %v1342
    %1837 = vmatpush.bf16.msra.mxu0 %v1340
    %1838 = vmatmul.bf16.gmra.mxu0 %v375
    %v1839 = vpop.f32.mrf.mxu0
    %v1840 = vadd.f32 %v1826, %v1839
    %v1841 = vpop.f32.mrf.mxu0
    %v1842 = vadd.f32 %v1828, %v1841
    %1843 = vdwg.mxu0
    %1844 = vmatpush.bf16.msra.mxu0 %v1370
    %1845 = vmatpush.bf16.msra.mxu0 %v1368
    %1846 = vmatpush.bf16.msra.mxu0 %v1366
    %1847 = vmatpush.bf16.msra.mxu0 %v1364
    %1848 = vmatpush.bf16.msra.mxu0 %v1362
    %1849 = vmatpush.bf16.msra.mxu0 %v1360
    %1850 = vmatpush.bf16.msra.mxu0 %v1358
    %1851 = vmatpush.bf16.msra.mxu0 %v1356
    %1852 = vmatmul.bf16.gmra.mxu0 %v376
    %v1853 = vpop.f32.mrf.mxu0
    %v1854 = vadd.f32 %v1840, %v1853
    %v1855 = vpop.f32.mrf.mxu0
    %v1856 = vadd.f32 %v1842, %v1855
    %1857 = vdwg.mxu0
    %1858 = vmatpush.bf16.msra.mxu0 %v1386
    %1859 = vmatpush.bf16.msra.mxu0 %v1384
    %1860 = vmatpush.bf16.msra.mxu0 %v1382
    %1861 = vmatpush.bf16.msra.mxu0 %v1380
    %1862 = vmatpush.bf16.msra.mxu0 %v1378
    %1863 = vmatpush.bf16.msra.mxu0 %v1376
    %1864 = vmatpush.bf16.msra.mxu0 %v1374
    %1865 = vmatpush.bf16.msra.mxu0 %v1372
    %1866 = vmatmul.bf16.gmra.mxu0 %v377
    %v1867 = vpop.f32.mrf.mxu0
    %v1868 = vadd.f32 %v1854, %v1867
    %v1869 = vpop.f32.mrf.mxu0
    %v1870 = vadd.f32 %v1856, %v1869
    %1871 = vdwg.mxu0
    %1872 = vmatpush.bf16.msra.mxu0 %v1402
    %1873 = vmatpush.bf16.msra.mxu0 %v1400
    %1874 = vmatpush.bf16.msra.mxu0 %v1398
    %1875 = vmatpush.bf16.msra.mxu0 %v1396
    %1876 = vmatpush.bf16.msra.mxu0 %v1394
    %1877 = vmatpush.bf16.msra.mxu0 %v1392
    %1878 = vmatpush.bf16.msra.mxu0 %v1390
    %1879 = vmatpush.bf16.msra.mxu0 %v1388
    %1880 = vmatmul.bf16.gmra.mxu0 %v378
    %v1881 = vpop.f32.mrf.mxu0
    %v1882 = vadd.f32 %v1868, %v1881
    %v1883 = vpop.f32.mrf.mxu0
    %v1884 = vadd.f32 %v1870, %v1883
    %1885 = vdwg.mxu0
    %1886 = vmatpush.bf16.msra.mxu0 %v1418
    %1887 = vmatpush.bf16.msra.mxu0 %v1416
    %1888 = vmatpush.bf16.msra.mxu0 %v1414
    %1889 = vmatpush.bf16.msra.mxu0 %v1412
    %1890 = vmatpush.bf16.msra.mxu0 %v1410
    %1891 = vmatpush.bf16.msra.mxu0 %v1408
    %1892 = vmatpush.bf16.msra.mxu0 %v1406
    %1893 = vmatpush.bf16.msra.mxu0 %v1404
    %1894 = vmatmul.bf16.gmra.mxu0 %v379
    %v1895 = vpop.f32.mrf.mxu0
    %v1896 = vadd.f32 %v1882, %v1895
    %v1897 = vpop.f32.mrf.mxu0
    %v1898 = vadd.f32 %v1884, %v1897
    %1899 = vdwg.mxu0
    %1900 = vmatpush.bf16.msra.mxu0 %v1179
    %1901 = vmatpush.bf16.msra.mxu0 %v1177
    %1902 = vmatpush.bf16.msra.mxu0 %v1175
    %1903 = vmatpush.bf16.msra.mxu0 %v1173
    %1904 = vmatpush.bf16.msra.mxu0 %v1171
    %1905 = vmatpush.bf16.msra.mxu0 %v1169
    %1906 = vmatpush.bf16.msra.mxu0 %v1167
    %1907 = vmatpush.bf16.msra.mxu0 %v1165
    %1908 = vmatmul.bf16.gmra.mxu0 %v364
    %v1909 = vpop.f32.mrf.mxu0
    %v1910 = vadd.f32 0.0, %v1909
    %v1911 = vpop.f32.mrf.mxu0
    %v1912 = vadd.f32 0.0, %v1911
    %1913 = vdwg.mxu0
    %1914 = vmatpush.bf16.msra.mxu0 %v1195
    %1915 = vmatpush.bf16.msra.mxu0 %v1193
    %1916 = vmatpush.bf16.msra.mxu0 %v1191
    %1917 = vmatpush.bf16.msra.mxu0 %v1189
    %1918 = vmatpush.bf16.msra.mxu0 %v1187
    %1919 = vmatpush.bf16.msra.mxu0 %v1185
    %1920 = vmatpush.bf16.msra.mxu0 %v1183
    %1921 = vmatpush.bf16.msra.mxu0 %v1181
    %1922 = vmatmul.bf16.gmra.mxu0 %v365
    %v1923 = vpop.f32.mrf.mxu0
    %v1924 = vadd.f32 %v1910, %v1923
    %v1925 = vpop.f32.mrf.mxu0
    %v1926 = vadd.f32 %v1912, %v1925
    %1927 = vdwg.mxu0
    %1928 = vmatpush.bf16.msra.mxu0 %v1211
    %1929 = vmatpush.bf16.msra.mxu0 %v1209
    %1930 = vmatpush.bf16.msra.mxu0 %v1207
    %1931 = vmatpush.bf16.msra.mxu0 %v1205
    %1932 = vmatpush.bf16.msra.mxu0 %v1203
    %1933 = vmatpush.bf16.msra.mxu0 %v1201
    %1934 = vmatpush.bf16.msra.mxu0 %v1199
    %1935 = vmatpush.bf16.msra.mxu0 %v1197
    %1936 = vmatmul.bf16.gmra.mxu0 %v366
    %v1937 = vpop.f32.mrf.mxu0
    %v1938 = vadd.f32 %v1924, %v1937
    %v1939 = vpop.f32.mrf.mxu0
    %v1940 = vadd.f32 %v1926, %v1939
    %1941 = vdwg.mxu0
    %1942 = vmatpush.bf16.msra.mxu0 %v1227
    %1943 = vmatpush.bf16.msra.mxu0 %v1225
    %1944 = vmatpush.bf16.msra.mxu0 %v1223
    %1945 = vmatpush.bf16.msra.mxu0 %v1221
    %1946 = vmatpush.bf16.msra.mxu0 %v1219
    %1947 = vmatpush.bf16.msra.mxu0 %v1217
    %1948 = vmatpush.bf16.msra.mxu0 %v1215
    %1949 = vmatpush.bf16.msra.mxu0 %v1213
    %1950 = vmatmul.bf16.gmra.mxu0 %v367
    %v1951 = vpop.f32.mrf.mxu0
    %v1952 = vadd.f32 %v1938, %v1951
    %v1953 = vpop.f32.mrf.mxu0
    %v1954 = vadd.f32 %v1940, %v1953
    %1955 = vdwg.mxu0
    %1956 = vmatpush.bf16.msra.mxu0 %v1243
    %1957 = vmatpush.bf16.msra.mxu0 %v1241
    %1958 = vmatpush.bf16.msra.mxu0 %v1239
    %1959 = vmatpush.bf16.msra.mxu0 %v1237
    %1960 = vmatpush.bf16.msra.mxu0 %v1235
    %1961 = vmatpush.bf16.msra.mxu0 %v1233
    %1962 = vmatpush.bf16.msra.mxu0 %v1231
    %1963 = vmatpush.bf16.msra.mxu0 %v1229
    %1964 = vmatmul.bf16.gmra.mxu0 %v368
    %v1965 = vpop.f32.mrf.mxu0
    %v1966 = vadd.f32 %v1952, %v1965
    %v1967 = vpop.f32.mrf.mxu0
    %v1968 = vadd.f32 %v1954, %v1967
    %1969 = vdwg.mxu0
    %1970 = vmatpush.bf16.msra.mxu0 %v1259
    %1971 = vmatpush.bf16.msra.mxu0 %v1257
    %1972 = vmatpush.bf16.msra.mxu0 %v1255
    %1973 = vmatpush.bf16.msra.mxu0 %v1253
    %1974 = vmatpush.bf16.msra.mxu0 %v1251
    %1975 = vmatpush.bf16.msra.mxu0 %v1249
    %1976 = vmatpush.bf16.msra.mxu0 %v1247
    %1977 = vmatpush.bf16.msra.mxu0 %v1245
    %1978 = vmatmul.bf16.gmra.mxu0 %v369
    %v1979 = vpop.f32.mrf.mxu0
    %v1980 = vadd.f32 %v1966, %v1979
    %v1981 = vpop.f32.mrf.mxu0
    %v1982 = vadd.f32 %v1968, %v1981
    %1983 = vdwg.mxu0
    %1984 = vmatpush.bf16.msra.mxu0 %v1275
    %1985 = vmatpush.bf16.msra.mxu0 %v1273
    %1986 = vmatpush.bf16.msra.mxu0 %v1271
    %1987 = vmatpush.bf16.msra.mxu0 %v1269
    %1988 = vmatpush.bf16.msra.mxu0 %v1267
    %1989 = vmatpush.bf16.msra.mxu0 %v1265
    %1990 = vmatpush.bf16.msra.mxu0 %v1263
    %1991 = vmatpush.bf16.msra.mxu0 %v1261
    %1992 = vmatmul.bf16.gmra.mxu0 %v370
    %v1993 = vpop.f32.mrf.mxu0
    %v1994 = vadd.f32 %v1980, %v1993
    %v1995 = vpop.f32.mrf.mxu0
    %v1996 = vadd.f32 %v1982, %v1995
    %1997 = vdwg.mxu0
    %1998 = vmatpush.bf16.msra.mxu0 %v1291
    %1999 = vmatpush.bf16.msra.mxu0 %v1289
    %2000 = vmatpush.bf16.msra.mxu0 %v1287
    %2001 = vmatpush.bf16.msra.mxu0 %v1285
    %2002 = vmatpush.bf16.msra.mxu0 %v1283
    %2003 = vmatpush.bf16.msra.mxu0 %v1281
    %2004 = vmatpush.bf16.msra.mxu0 %v1279
    %2005 = vmatpush.bf16.msra.mxu0 %v1277
    %2006 = vmatmul.bf16.gmra.mxu0 %v371
    %v2007 = vpop.f32.mrf.mxu0
    %v2008 = vadd.f32 %v1994, %v2007
    %v2009 = vpop.f32.mrf.mxu0
    %v2010 = vadd.f32 %v1996, %v2009
    %2011 = vdwg.mxu0
    %2012 = vmatpush.bf16.msra.mxu0 %v1307
    %2013 = vmatpush.bf16.msra.mxu0 %v1305
    %2014 = vmatpush.bf16.msra.mxu0 %v1303
    %2015 = vmatpush.bf16.msra.mxu0 %v1301
    %2016 = vmatpush.bf16.msra.mxu0 %v1299
    %2017 = vmatpush.bf16.msra.mxu0 %v1297
    %2018 = vmatpush.bf16.msra.mxu0 %v1295
    %2019 = vmatpush.bf16.msra.mxu0 %v1293
    %2020 = vmatmul.bf16.gmra.mxu0 %v372
    %v2021 = vpop.f32.mrf.mxu0
    %v2022 = vadd.f32 %v2008, %v2021
    %v2023 = vpop.f32.mrf.mxu0
    %v2024 = vadd.f32 %v2010, %v2023
    %2025 = vdwg.mxu0
    %2026 = vmatpush.bf16.msra.mxu0 %v1323
    %2027 = vmatpush.bf16.msra.mxu0 %v1321
    %2028 = vmatpush.bf16.msra.mxu0 %v1319
    %2029 = vmatpush.bf16.msra.mxu0 %v1317
    %2030 = vmatpush.bf16.msra.mxu0 %v1315
    %2031 = vmatpush.bf16.msra.mxu0 %v1313
    %2032 = vmatpush.bf16.msra.mxu0 %v1311
    %2033 = vmatpush.bf16.msra.mxu0 %v1309
    %2034 = vmatmul.bf16.gmra.mxu0 %v373
    %v2035 = vpop.f32.mrf.mxu0
    %v2036 = vadd.f32 %v2022, %v2035
    %v2037 = vpop.f32.mrf.mxu0
    %v2038 = vadd.f32 %v2024, %v2037
    %2039 = vdwg.mxu0
    %2040 = vmatpush.bf16.msra.mxu0 %v1339
    %2041 = vmatpush.bf16.msra.mxu0 %v1337
    %2042 = vmatpush.bf16.msra.mxu0 %v1335
    %2043 = vmatpush.bf16.msra.mxu0 %v1333
    %2044 = vmatpush.bf16.msra.mxu0 %v1331
    %2045 = vmatpush.bf16.msra.mxu0 %v1329
    %2046 = vmatpush.bf16.msra.mxu0 %v1327
    %2047 = vmatpush.bf16.msra.mxu0 %v1325
    %2048 = vmatmul.bf16.gmra.mxu0 %v374
    %v2049 = vpop.f32.mrf.mxu0
    %v2050 = vadd.f32 %v2036, %v2049
    %v2051 = vpop.f32.mrf.mxu0
    %v2052 = vadd.f32 %v2038, %v2051
    %2053 = vdwg.mxu0
    %2054 = vmatpush.bf16.msra.mxu0 %v1355
    %2055 = vmatpush.bf16.msra.mxu0 %v1353
    %2056 = vmatpush.bf16.msra.mxu0 %v1351
    %2057 = vmatpush.bf16.msra.mxu0 %v1349
    %2058 = vmatpush.bf16.msra.mxu0 %v1347
    %2059 = vmatpush.bf16.msra.mxu0 %v1345
    %2060 = vmatpush.bf16.msra.mxu0 %v1343
    %2061 = vmatpush.bf16.msra.mxu0 %v1341
    %2062 = vmatmul.bf16.gmra.mxu0 %v375
    %v2063 = vpop.f32.mrf.mxu0
    %v2064 = vadd.f32 %v2050, %v2063
    %v2065 = vpop.f32.mrf.mxu0
    %v2066 = vadd.f32 %v2052, %v2065
    %2067 = vdwg.mxu0
    %2068 = vmatpush.bf16.msra.mxu0 %v1371
    %2069 = vmatpush.bf16.msra.mxu0 %v1369
    %2070 = vmatpush.bf16.msra.mxu0 %v1367
    %2071 = vmatpush.bf16.msra.mxu0 %v1365
    %2072 = vmatpush.bf16.msra.mxu0 %v1363
    %2073 = vmatpush.bf16.msra.mxu0 %v1361
    %2074 = vmatpush.bf16.msra.mxu0 %v1359
    %2075 = vmatpush.bf16.msra.mxu0 %v1357
    %2076 = vmatmul.bf16.gmra.mxu0 %v376
    %v2077 = vpop.f32.mrf.mxu0
    %v2078 = vadd.f32 %v2064, %v2077
    %v2079 = vpop.f32.mrf.mxu0
    %v2080 = vadd.f32 %v2066, %v2079
    %2081 = vdwg.mxu0
    %2082 = vmatpush.bf16.msra.mxu0 %v1387
    %2083 = vmatpush.bf16.msra.mxu0 %v1385
    %2084 = vmatpush.bf16.msra.mxu0 %v1383
    %2085 = vmatpush.bf16.msra.mxu0 %v1381
    %2086 = vmatpush.bf16.msra.mxu0 %v1379
    %2087 = vmatpush.bf16.msra.mxu0 %v1377
    %2088 = vmatpush.bf16.msra.mxu0 %v1375
    %2089 = vmatpush.bf16.msra.mxu0 %v1373
    %2090 = vmatmul.bf16.gmra.mxu0 %v377
    %v2091 = vpop.f32.mrf.mxu0
    %v2092 = vadd.f32 %v2078, %v2091
    %v2093 = vpop.f32.mrf.mxu0
    %v2094 = vadd.f32 %v2080, %v2093
    %2095 = vdwg.mxu0
    %2096 = vmatpush.bf16.msra.mxu0 %v1403
    %2097 = vmatpush.bf16.msra.mxu0 %v1401
    %2098 = vmatpush.bf16.msra.mxu0 %v1399
    %2099 = vmatpush.bf16.msra.mxu0 %v1397
    %2100 = vmatpush.bf16.msra.mxu0 %v1395
    %2101 = vmatpush.bf16.msra.mxu0 %v1393
    %2102 = vmatpush.bf16.msra.mxu0 %v1391
    %2103 = vmatpush.bf16.msra.mxu0 %v1389
    %2104 = vmatmul.bf16.gmra.mxu0 %v378
    %v2105 = vpop.f32.mrf.mxu0
    %v2106 = vadd.f32 %v2092, %v2105
    %v2107 = vpop.f32.mrf.mxu0
    %v2108 = vadd.f32 %v2094, %v2107
    %2109 = vdwg.mxu0
    %2110 = vmatpush.bf16.msra.mxu0 %v1419
    %2111 = vmatpush.bf16.msra.mxu0 %v1417
    %2112 = vmatpush.bf16.msra.mxu0 %v1415
    %2113 = vmatpush.bf16.msra.mxu0 %v1413
    %2114 = vmatpush.bf16.msra.mxu0 %v1411
    %2115 = vmatpush.bf16.msra.mxu0 %v1409
    %2116 = vmatpush.bf16.msra.mxu0 %v1407
    %2117 = vmatpush.bf16.msra.mxu0 %v1405
    %2118 = vmatmul.bf16.gmra.mxu0 %v379
    %v2119 = vpop.f32.mrf.mxu0
    %v2120 = vadd.f32 %v2106, %v2119
    %v2121 = vpop.f32.mrf.mxu0
    %v2122 = vadd.f32 %v2108, %v2121
    %2123 = vdwg.mxu0
    %2124 = vst [vmem:[#allocation7] sm:$0xff] %v1896
    %2125 = vst [vmem:[#allocation7 + $0x8] sm:$0xff] %v2120
    %2126 = vst [vmem:[#allocation7 + $0x10] sm:$0xff] %v1898
    %2127 = vst [vmem:[#allocation7 + $0x18] sm:$0xff] %v2122
    // Predicated region
    $region18: #{tpu_custom_call.1} parent=1 // pred_check
      _
    $region19: #{tpu_custom_call.1} parent=1 // pred_check_branch
      %2129 = sbr.rel (0) target = $region21
    $region20: #{tpu_custom_call.1} parent=1 // pred_region
      %2131 = vsyncadd [#allocation4], 0
      %s2132 = sshll.u32 [#allocation7], 4
      %s2133 = int_to_ptr.vmem [resolvable:$true] %s2132
      %s2134 = sshll.u32 %s2, 4
      %s2135 = int_to_ptr.hbm [resolvable:$true] %s2134
      %2140 = dma.vmem_to_hbm [thread:$0]  %s2133, 512, %s2135, [#allocation4], 256, 256, 16
    $region21: #{tpu_custom_call.1} parent=1 // pred_fallthru
      _
    // Predicated region
    $region22: #{tpu_custom_call.1} parent=1 // pred_check
      _
    $region23: #{tpu_custom_call.1} parent=1 // pred_check_branch
      %2142 = sbr.rel (0) target = $region25
    $region24: #{tpu_custom_call.1} parent=1 // pred_region
      %2144 = dma.done [#allocation4], 512
    $region25: #{tpu_custom_call.1} parent=1 // pred_fallthru
      _
    %2145 = vsyncpa [#allocation3], 1
    %2146 = vsyncpa [#allocation6], 1
    %2147 = vsyncpa [#allocation4], 1

</llo_original>
